<compile_context>
chip_gen: v7x
topology: tpu7x:2x2x1
jax: 0.10.0
libtpu: 0.0.40
codegen_flags: <defaults>
</compile_context>

<pallas_src>
import functools

import jax
import jax.numpy as jnp
from jax.experimental import pallas as pl
from jax.experimental.pallas import tpu as pltpu


def _fused_conv3x3_relu_kernel(fea_ref, sem_ref, w_ref, b_ref, m_ref,
                               o_ref, xpad_ref, *, width):
    # fea_ref : (1, C,   HW)       one batch element of fea, spatial flattened
    # sem_ref : (1, 3,   HW)       one batch element of sem
    # w_ref   : (9, Cout, Cin)     conv weight per tap (t = kh*3 + kw), Cin = C+3
    # b_ref   : (Cout, 1)
    # m_ref   : (2, HW)            lane masks: row 0 kills w==0, row 1 kills w==W-1
    # o_ref   : (1, Cout, HW)
    # xpad_ref: (Cin, base + HW + W + 1)  VMEM scratch, row-padded flat image
    W = width
    C = fea_ref.shape[1]
    HW = fea_ref.shape[2]
    Cout = o_ref.shape[1]
    Cin = xpad_ref.shape[0]
    padlen = xpad_ref.shape[1]
    base = padlen - HW - (W + 1)          # lane-aligned offset of pixel (0, 0)

    # --- fused concat + zero padding (VMEM only, no extra HBM traffic) ------
    xpad_ref[:, 0:base] = jnp.zeros((Cin, base), dtype=jnp.float32)
    xpad_ref[:, base + HW:] = jnp.zeros((Cin, W + 1), dtype=jnp.float32)
    xpad_ref[0:C, base:base + HW] = fea_ref[0]     # fea channels
    xpad_ref[C:, base:base + HW] = sem_ref[0]      # sem channels ("concat")

    masks = m_ref[...]
    mask_l = masks[0:1, :]                # 0.0 where w == 0     (for kw == 0)
    mask_r = masks[1:2, :]                # 0.0 where w == W - 1 (for kw == 2)

    # --- 3x3 conv: 9 accumulated MXU matmuls (Cout, Cin) @ (Cin, HW) --------
    acc = jnp.zeros((Cout, HW), dtype=jnp.float32)
    for kh in range(3):
        for kw in range(3):
            start = base + (kh - 1) * W + (kw - 1)
            patch = xpad_ref[:, start:start + HW]          # (Cin, HW)
            if kw == 0:
                patch = patch * mask_l
            elif kw == 2:
                patch = patch * mask_r
            acc = acc + jnp.dot(w_ref[kh * 3 + kw], patch,
                                preferred_element_type=jnp.float32)

    out = jnp.maximum(acc + b_ref[...], 0.0)       # bias + ReLU
    o_ref[0] = out.astype(o_ref.dtype)


def semantic_fusion_unit_forward(fea_nchw, sem_nchw, conv_w_oihw, conv_b,
                                 *, interpret=False):
    """PyTorch-semantics forward.

    fea_nchw: (N, C, H, W); sem_nchw: (N, 3, H, W)
    conv_w_oihw: (C, C+3, 3, 3)  (PyTorch Conv2d weight layout OIHW)
    conv_b: (C,)
    returns: (N, C, H, W)
    """
    N, C, H, W = fea_nchw.shape
    assert sem_nchw.shape == (N, 3, H, W), sem_nchw.shape
    Cout = conv_w_oihw.shape[0]
    Cin = C + 3
    HW = H * W
    base = ((W + 1 + 127) // 128) * 128   # lane-aligned leading pad (>= W+1)
    padlen = base + HW + (W + 1)

    # Free row-major reshapes (no HBM copies): NCHW -> (N, C, HW).
    fea2 = fea_nchw.reshape(N, C, HW)
    sem2 = sem_nchw.reshape(N, 3, HW)
    # Weight laid out once, outside the kernel, in final matmul layout:
    # OIHW -> (tap, Cout, Cin) with tap = kh*3 + kw.  fea channels first, then sem.
    w_taps = jnp.transpose(conv_w_oihw, (2, 3, 0, 1)).reshape(9, Cout, Cin)
    b2 = conv_b.reshape(Cout, 1)
    # Lane masks killing column wrap-around of the row-padded flat layout.
    w_idx = jnp.arange(HW, dtype=jnp.int32) % W
    masks = jnp.stack([(w_idx >= 1).astype(jnp.float32),
                       (w_idx <= W - 2).astype(jnp.float32)], axis=0)  # (2, HW)

    kernel = functools.partial(_fused_conv3x3_relu_kernel, width=W)

    out = pl.pallas_call(
        kernel,
        out_shape=jax.ShapeDtypeStruct((N, Cout, HW), jnp.float32),
        grid_spec=pltpu.PrefetchScalarGridSpec(
            num_scalar_prefetch=0,
            grid=(N,),
            in_specs=[
                pl.BlockSpec((1, C, HW), lambda n: (n, 0, 0)),        # fea
                pl.BlockSpec((1, 3, HW), lambda n: (n, 0, 0)),        # sem
                pl.BlockSpec((9, Cout, Cin), lambda n: (0, 0, 0)),    # weights
                pl.BlockSpec((Cout, 1), lambda n: (0, 0)),            # bias
                pl.BlockSpec((2, HW), lambda n: (0, 0)),              # edge masks
            ],
            out_specs=pl.BlockSpec((1, Cout, HW), lambda n: (n, 0, 0)),
            scratch_shapes=[pltpu.VMEM((Cin, padlen), jnp.float32)],
        ),
        compiler_params=pltpu.CompilerParams(
            dimension_semantics=("parallel",),
            vmem_limit_bytes=64 * 1024 * 1024,
        ),
        interpret=interpret,
    )(fea2, sem2, w_taps, b2, masks)

    # Free reshape back: (N, Cout, HW) is already NCHW order.
    return out.reshape(N, Cout, H, W)


def _reference_forward(fea, sem, conv_w_oihw, conv_b):
    """Pure-JAX reference (lax conv) for numerical verification."""
    cat = jnp.concatenate([fea, sem], axis=1)
    y = jax.lax.conv_general_dilated(
        cat, conv_w_oihw, window_strides=(1, 1), padding=((1, 1), (1, 1)),
        dimension_numbers=("NCHW", "OIHW", "NCHW"))
    y = y + conv_b.reshape(1, -1, 1, 1)
    return jnp.maximum(y, 0.0)


if __name__ == "__main__":
    # Small deterministic shapes: batch=2, channels=4, spatial=16.
    N, C, H, W = 2, 4, 16, 16
    key = jax.random.PRNGKey(0)
    k_fea, k_sem, k_w, k_b = jax.random.split(key, 4)

    fea = jax.random.normal(k_fea, (N, C, H, W), dtype=jnp.float32)
    sem = jax.random.normal(k_sem, (N, 3, H, W), dtype=jnp.float32)

    # Deterministic parameter init for self.conv (Conv2d(C+3 -> C, 3x3, pad=1)).
    conv_w = 0.1 * jax.random.normal(k_w, (C, C + 3, 3, 3), dtype=jnp.float32)
    conv_b = 0.1 * jax.random.normal(k_b, (C,), dtype=jnp.float32)
    # TODO(synk): self.conv0 exists in __init__ but is not used by forward(); not computed.

    out = semantic_fusion_unit_forward(fea, sem, conv_w, conv_b)
    out = jax.block_until_ready(out)

    ref = _reference_forward(fea, sem, conv_w, conv_b)
    assert out.shape == (N, C, H, W), out.shape
    assert jnp.allclose(out, ref, atol=1e-4, rtol=1e-4), float(
        jnp.max(jnp.abs(out - ref)))

    print("KERNEL_OK")
</pallas_src>

<mosaic_0001>
module attributes {stable_mosaic.version = 11 : i64} {
  func.func @_fused_conv3x3_relu_kernel(%arg0: i32, %arg1: memref<1x4x256xf32, #tpu.memory_space<vmem>>, %arg2: memref<1x3x256xf32, #tpu.memory_space<vmem>>, %arg3: memref<9x4x7xf32, #tpu.memory_space<vmem>>, %arg4: memref<4x1xf32, #tpu.memory_space<vmem>>, %arg5: memref<2x256xf32, #tpu.memory_space<vmem>>, %arg6: memref<1x4x256xf32, #tpu.memory_space<vmem>>, %arg7: memref<7x401xf32, #tpu.memory_space<vmem>>) attributes {dimension_semantics = [#tpu.dimension_semantics<parallel>], iteration_bounds = array<i64: 2>, scalar_prefetch = 0 : i64, scratch_operands = 1 : i64, tpu.core_type = #tpu.core_type<tc>, window_params = [{transform_indices = @transform_0, window_bounds = array<i64: 1, 4, 256>}, {transform_indices = @transform_1, window_bounds = array<i64: 1, 3, 256>}, {pipeline_mode = #tpu.pipeline_mode<synchronous>, transform_indices = @transform_2, window_bounds = array<i64: 9, 4, 7>}, {pipeline_mode = #tpu.pipeline_mode<synchronous>, transform_indices = @transform_3, window_bounds = array<i64: 4, 1>}, {pipeline_mode = #tpu.pipeline_mode<synchronous>, transform_indices = @transform_4, window_bounds = array<i64: 2, 256>}, {transform_indices = @transform_5, window_bounds = array<i64: 1, 4, 256>}]} {
    %cst = arith.constant 0.000000e+00 : f32
    %0 = vector.broadcast %cst : f32 to vector<7x128xf32>
    %c0 = arith.constant 0 : index
    %c0_0 = arith.constant 0 : index
    %1 = vector.load %arg7[%c0, %c0_0] : memref<7x401xf32, #tpu.memory_space<vmem>>, vector<7x128xf32>
    tpu.vector_store %arg7[%c0, %c0_0], %0 {strides = array<i32>} : memref<7x401xf32, #tpu.memory_space<vmem>>, vector<7x128xf32>,
    %cst_1 = arith.constant 0.000000e+00 : f32
    %2 = vector.broadcast %cst_1 : f32 to vector<7x17xf32>
    %c0_2 = arith.constant 0 : index
    %c384 = arith.constant 384 : index
    %3 = vector.load %arg7[%c0_2, %c384] : memref<7x401xf32, #tpu.memory_space<vmem>>, vector<7x17xf32>
    tpu.vector_store %arg7[%c0_2, %c384], %2 {strides = array<i32>} : memref<7x401xf32, #tpu.memory_space<vmem>>, vector<7x17xf32>,
    %c0_3 = arith.constant 0 : index
    %c0_4 = arith.constant 0 : index
    %c0_5 = arith.constant 0 : index
    %4 = vector.load %arg1[%c0_3, %c0_4, %c0_5] : memref<1x4x256xf32, #tpu.memory_space<vmem>>, vector<1x4x256xf32>
    %5 = vector.shape_cast %4 : vector<1x4x256xf32> to vector<4x256xf32>
    %c0_6 = arith.constant 0 : index
    %c128 = arith.constant 128 : index
    %6 = vector.load %arg7[%c0_6, %c128] : memref<7x401xf32, #tpu.memory_space<vmem>>, vector<4x256xf32>
    tpu.vector_store %arg7[%c0_6, %c128], %5 {strides = array<i32>} : memref<7x401xf32, #tpu.memory_space<vmem>>, vector<4x256xf32>,
    %c0_7 = arith.constant 0 : index
    %c0_8 = arith.constant 0 : index
    %c0_9 = arith.constant 0 : index
    %7 = vector.load %arg2[%c0_7, %c0_8, %c0_9] : memref<1x3x256xf32, #tpu.memory_space<vmem>>, vector<1x3x256xf32>
    %8 = vector.shape_cast %7 : vector<1x3x256xf32> to vector<3x256xf32>
    %c4 = arith.constant 4 : index
    %c128_10 = arith.constant 128 : index
    %9 = vector.load %arg7[%c4, %c128_10] : memref<7x401xf32, #tpu.memory_space<vmem>>, vector<3x256xf32>
    tpu.vector_store %arg7[%c4, %c128_10], %8 {strides = array<i32>} : memref<7x401xf32, #tpu.memory_space<vmem>>, vector<3x256xf32>,
    %c0_11 = arith.constant 0 : index
    %c0_12 = arith.constant 0 : index
    %10 = vector.load %arg5[%c0_11, %c0_12] : memref<2x256xf32, #tpu.memory_space<vmem>>, vector<2x256xf32>
    %11 = vector.extract_strided_slice %10 {offsets = [0, 0], sizes = [1, 256], strides = [1, 1]} : vector<2x256xf32> to vector<1x256xf32>
    %12 = vector.extract_strided_slice %10 {offsets = [1, 0], sizes = [1, 256], strides = [1, 1]} : vector<2x256xf32> to vector<1x256xf32>
    %cst_13 = arith.constant 0.000000e+00 : f32
    %13 = vector.broadcast %cst_13 : f32 to vector<4x256xf32>
    %c0_14 = arith.constant 0 : index
    %c111 = arith.constant 111 : index
    %14 = vector.load %arg7[%c0_14, %c111] : memref<7x401xf32, #tpu.memory_space<vmem>>, vector<7x256xf32>
    %15 = vector.broadcast %11 : vector<1x256xf32> to vector<7x256xf32>
    %16 = arith.mulf %14, %15 : vector<7x256xf32>
    %c0_15 = arith.constant 0 : index
    %c0_16 = arith.constant 0 : index
    %c0_17 = arith.constant 0 : index
    %17 = vector.load %arg3[%c0_15, %c0_16, %c0_17] : memref<9x4x7xf32, #tpu.memory_space<vmem>>, vector<1x4x7xf32>
    %18 = vector.shape_cast %17 : vector<1x4x7xf32> to vector<4x7xf32>
    %cst_18 = arith.constant dense<0.000000e+00> : vector<4x256xf32>
    %19 = tpu.matmul %18, %16, %cst_18 {dimension_numbers = #tpu.dot_dimension_numbers<[1], [0], [0], [1], [0, 0, 1, 1], [], []>} : vector<4x7xf32>, vector<7x256xf32>, vector<4x256xf32> -> vector<4x256xf32>
    %20 = arith.addf %13, %19 : vector<4x256xf32>
    %c0_19 = arith.constant 0 : index
    %c112 = arith.constant 112 : index
    %21 = vector.load %arg7[%c0_19, %c112] : memref<7x401xf32, #tpu.memory_space<vmem>>, vector<7x256xf32>
    %c1 = arith.constant 1 : index
    %c0_20 = arith.constant 0 : index
    %c0_21 = arith.constant 0 : index
    %22 = vector.load %arg3[%c1, %c0_20, %c0_21] : memref<9x4x7xf32, #tpu.memory_space<vmem>>, vector<1x4x7xf32>
    %23 = vector.shape_cast %22 : vector<1x4x7xf32> to vector<4x7xf32>
    %cst_22 = arith.constant dense<0.000000e+00> : vector<4x256xf32>
    %24 = tpu.matmul %23, %21, %cst_22 {dimension_numbers = #tpu.dot_dimension_numbers<[1], [0], [0], [1], [0, 0, 1, 1], [], []>} : vector<4x7xf32>, vector<7x256xf32>, vector<4x256xf32> -> vector<4x256xf32>
    %25 = arith.addf %20, %24 : vector<4x256xf32>
    %c0_23 = arith.constant 0 : index
    %c113 = arith.constant 113 : index
    %26 = vector.load %arg7[%c0_23, %c113] : memref<7x401xf32, #tpu.memory_space<vmem>>, vector<7x256xf32>
    %27 = vector.broadcast %12 : vector<1x256xf32> to vector<7x256xf32>
    %28 = arith.mulf %26, %27 : vector<7x256xf32>
    %c2 = arith.constant 2 : index
    %c0_24 = arith.constant 0 : index
    %c0_25 = arith.constant 0 : index
    %29 = vector.load %arg3[%c2, %c0_24, %c0_25] : memref<9x4x7xf32, #tpu.memory_space<vmem>>, vector<1x4x7xf32>
    %30 = vector.shape_cast %29 : vector<1x4x7xf32> to vector<4x7xf32>
    %cst_26 = arith.constant dense<0.000000e+00> : vector<4x256xf32>
    %31 = tpu.matmul %30, %28, %cst_26 {dimension_numbers = #tpu.dot_dimension_numbers<[1], [0], [0], [1], [0, 0, 1, 1], [], []>} : vector<4x7xf32>, vector<7x256xf32>, vector<4x256xf32> -> vector<4x256xf32>
    %32 = arith.addf %25, %31 : vector<4x256xf32>
    %c0_27 = arith.constant 0 : index
    %c127 = arith.constant 127 : index
    %33 = vector.load %arg7[%c0_27, %c127] : memref<7x401xf32, #tpu.memory_space<vmem>>, vector<7x256xf32>
    %34 = vector.broadcast %11 : vector<1x256xf32> to vector<7x256xf32>
    %35 = arith.mulf %33, %34 : vector<7x256xf32>
    %c3 = arith.constant 3 : index
    %c0_28 = arith.constant 0 : index
    %c0_29 = arith.constant 0 : index
    %36 = vector.load %arg3[%c3, %c0_28, %c0_29] : memref<9x4x7xf32, #tpu.memory_space<vmem>>, vector<1x4x7xf32>
    %37 = vector.shape_cast %36 : vector<1x4x7xf32> to vector<4x7xf32>
    %cst_30 = arith.constant dense<0.000000e+00> : vector<4x256xf32>
    %38 = tpu.matmul %37, %35, %cst_30 {dimension_numbers = #tpu.dot_dimension_numbers<[1], [0], [0], [1], [0, 0, 1, 1], [], []>} : vector<4x7xf32>, vector<7x256xf32>, vector<4x256xf32> -> vector<4x256xf32>
    %39 = arith.addf %32, %38 : vector<4x256xf32>
    %c0_31 = arith.constant 0 : index
    %c128_32 = arith.constant 128 : index
    %40 = vector.load %arg7[%c0_31, %c128_32] : memref<7x401xf32, #tpu.memory_space<vmem>>, vector<7x256xf32>
    %c4_33 = arith.constant 4 : index
    %c0_34 = arith.constant 0 : index
    %c0_35 = arith.constant 0 : index
    %41 = vector.load %arg3[%c4_33, %c0_34, %c0_35] : memref<9x4x7xf32, #tpu.memory_space<vmem>>, vector<1x4x7xf32>
    %42 = vector.shape_cast %41 : vector<1x4x7xf32> to vector<4x7xf32>
    %cst_36 = arith.constant dense<0.000000e+00> : vector<4x256xf32>
    %43 = tpu.matmul %42, %40, %cst_36 {dimension_numbers = #tpu.dot_dimension_numbers<[1], [0], [0], [1], [0, 0, 1, 1], [], []>} : vector<4x7xf32>, vector<7x256xf32>, vector<4x256xf32> -> vector<4x256xf32>
    %44 = arith.addf %39, %43 : vector<4x256xf32>
    %c0_37 = arith.constant 0 : index
    %c129 = arith.constant 129 : index
    %45 = vector.load %arg7[%c0_37, %c129] : memref<7x401xf32, #tpu.memory_space<vmem>>, vector<7x256xf32>
    %46 = vector.broadcast %12 : vector<1x256xf32> to vector<7x256xf32>
    %47 = arith.mulf %45, %46 : vector<7x256xf32>
    %c5 = arith.constant 5 : index
    %c0_38 = arith.constant 0 : index
    %c0_39 = arith.constant 0 : index
    %48 = vector.load %arg3[%c5, %c0_38, %c0_39] : memref<9x4x7xf32, #tpu.memory_space<vmem>>, vector<1x4x7xf32>
    %49 = vector.shape_cast %48 : vector<1x4x7xf32> to vector<4x7xf32>
    %cst_40 = arith.constant dense<0.000000e+00> : vector<4x256xf32>
    %50 = tpu.matmul %49, %47, %cst_40 {dimension_numbers = #tpu.dot_dimension_numbers<[1], [0], [0], [1], [0, 0, 1, 1], [], []>} : vector<4x7xf32>, vector<7x256xf32>, vector<4x256xf32> -> vector<4x256xf32>
    %51 = arith.addf %44, %50 : vector<4x256xf32>
    %c0_41 = arith.constant 0 : index
    %c143 = arith.constant 143 : index
    %52 = vector.load %arg7[%c0_41, %c143] : memref<7x401xf32, #tpu.memory_space<vmem>>, vector<7x256xf32>
    %53 = vector.broadcast %11 : vector<1x256xf32> to vector<7x256xf32>
    %54 = arith.mulf %52, %53 : vector<7x256xf32>
    %c6 = arith.constant 6 : index
    %c0_42 = arith.constant 0 : index
    %c0_43 = arith.constant 0 : index
    %55 = vector.load %arg3[%c6, %c0_42, %c0_43] : memref<9x4x7xf32, #tpu.memory_space<vmem>>, vector<1x4x7xf32>
    %56 = vector.shape_cast %55 : vector<1x4x7xf32> to vector<4x7xf32>
    %cst_44 = arith.constant dense<0.000000e+00> : vector<4x256xf32>
    %57 = tpu.matmul %56, %54, %cst_44 {dimension_numbers = #tpu.dot_dimension_numbers<[1], [0], [0], [1], [0, 0, 1, 1], [], []>} : vector<4x7xf32>, vector<7x256xf32>, vector<4x256xf32> -> vector<4x256xf32>
    %58 = arith.addf %51, %57 : vector<4x256xf32>
    %c0_45 = arith.constant 0 : index
    %c144 = arith.constant 144 : index
    %59 = vector.load %arg7[%c0_45, %c144] : memref<7x401xf32, #tpu.memory_space<vmem>>, vector<7x256xf32>
    %c7 = arith.constant 7 : index
    %c0_46 = arith.constant 0 : index
    %c0_47 = arith.constant 0 : index
    %60 = vector.load %arg3[%c7, %c0_46, %c0_47] : memref<9x4x7xf32, #tpu.memory_space<vmem>>, vector<1x4x7xf32>
    %61 = vector.shape_cast %60 : vector<1x4x7xf32> to vector<4x7xf32>
    %cst_48 = arith.constant dense<0.000000e+00> : vector<4x256xf32>
    %62 = tpu.matmul %61, %59, %cst_48 {dimension_numbers = #tpu.dot_dimension_numbers<[1], [0], [0], [1], [0, 0, 1, 1], [], []>} : vector<4x7xf32>, vector<7x256xf32>, vector<4x256xf32> -> vector<4x256xf32>
    %63 = arith.addf %58, %62 : vector<4x256xf32>
    %c0_49 = arith.constant 0 : index
    %c145 = arith.constant 145 : index
    %64 = vector.load %arg7[%c0_49, %c145] : memref<7x401xf32, #tpu.memory_space<vmem>>, vector<7x256xf32>
    %65 = vector.broadcast %12 : vector<1x256xf32> to vector<7x256xf32>
    %66 = arith.mulf %64, %65 : vector<7x256xf32>
    %c8 = arith.constant 8 : index
    %c0_50 = arith.constant 0 : index
    %c0_51 = arith.constant 0 : index
    %67 = vector.load %arg3[%c8, %c0_50, %c0_51] : memref<9x4x7xf32, #tpu.memory_space<vmem>>, vector<1x4x7xf32>
    %68 = vector.shape_cast %67 : vector<1x4x7xf32> to vector<4x7xf32>
    %cst_52 = arith.constant dense<0.000000e+00> : vector<4x256xf32>
    %69 = tpu.matmul %68, %66, %cst_52 {dimension_numbers = #tpu.dot_dimension_numbers<[1], [0], [0], [1], [0, 0, 1, 1], [], []>} : vector<4x7xf32>, vector<7x256xf32>, vector<4x256xf32> -> vector<4x256xf32>
    %70 = arith.addf %63, %69 : vector<4x256xf32>
    %c0_53 = arith.constant 0 : index
    %c0_54 = arith.constant 0 : index
    %71 = vector.load %arg4[%c0_53, %c0_54] : memref<4x1xf32, #tpu.memory_space<vmem>>, vector<4x1xf32>
    %72 = vector.broadcast %71 : vector<4x1xf32> to vector<4x256xf32>
    %73 = arith.addf %70, %72 : vector<4x256xf32>
    %cst_55 = arith.constant 0.000000e+00 : f32
    %74 = vector.broadcast %cst_55 : f32 to vector<4x256xf32>
    %75 = arith.maximumf %73, %74 : vector<4x256xf32>
    %c0_56 = arith.constant 0 : index
    %c0_57 = arith.constant 0 : index
    %c0_58 = arith.constant 0 : index
    %76 = vector.load %arg6[%c0_56, %c0_57, %c0_58] : memref<1x4x256xf32, #tpu.memory_space<vmem>>, vector<1x4x256xf32>
    %77 = vector.shape_cast %76 : vector<1x4x256xf32> to vector<4x256xf32>
    %78 = vector.shape_cast %75 : vector<4x256xf32> to vector<1x4x256xf32>
    tpu.vector_store %arg6[%c0_56, %c0_57, %c0_58], %78 {strides = array<i32>} : memref<1x4x256xf32, #tpu.memory_space<vmem>>, vector<1x4x256xf32>,
    return
  }
  func.func @transform_0(%arg0: i32) -> (i32, i32, i32) {
    %c0_i32 = arith.constant 0 : i32
    %c0_i32_0 = arith.constant 0 : i32
    %c0_i32_1 = arith.constant 0 : i32
    return %arg0, %c0_i32, %c0_i32_0 : i32, i32, i32
  }
  func.func @transform_1(%arg0: i32) -> (i32, i32, i32) {
    %c0_i32 = arith.constant 0 : i32
    %c0_i32_0 = arith.constant 0 : i32
    %c0_i32_1 = arith.constant 0 : i32
    return %arg0, %c0_i32, %c0_i32_0 : i32, i32, i32
  }
  func.func @transform_2(%arg0: i32) -> (i32, i32, i32) {
    %c0_i32 = arith.constant 0 : i32
    %c0_i32_0 = arith.constant 0 : i32
    %c0_i32_1 = arith.constant 0 : i32
    %c0_i32_2 = arith.constant 0 : i32
    return %c0_i32, %c0_i32_0, %c0_i32_1 : i32, i32, i32
  }
  func.func @transform_3(%arg0: i32) -> (i32, i32) {
    %c0_i32 = arith.constant 0 : i32
    %c0_i32_0 = arith.constant 0 : i32
    %c0_i32_1 = arith.constant 0 : i32
    return %c0_i32, %c0_i32_0 : i32, i32
  }
  func.func @transform_4(%arg0: i32) -> (i32, i32) {
    %c0_i32 = arith.constant 0 : i32
    %c0_i32_0 = arith.constant 0 : i32
    %c0_i32_1 = arith.constant 0 : i32
    return %c0_i32, %c0_i32_0 : i32, i32
  }
  func.func @transform_5(%arg0: i32) -> (i32, i32, i32) {
    %c0_i32 = arith.constant 0 : i32
    %c0_i32_0 = arith.constant 0 : i32
    %c0_i32_1 = arith.constant 0 : i32
    return %arg0, %c0_i32, %c0_i32_0 : i32, i32, i32
  }
}

</mosaic_0001>

<llo_original>
// kernel: tpu_custom_call.1
$region0: #{tpu_custom_call.1}
  #allocation0 [shape = 'u32[]', space=smem, size = 0x4, offset = 0x4, fixed_abs, tag = 'smem constant byte address 0x4 - core index']
  #allocation1 [shape = 'u32[144,128]{1,0:T(1,128)}', space=vmem, size = 0x12000, scoped, tag = 'internal scratch']
  #allocation2 [shape = 'f32[7,401]{1,0:T(8,128)}', space=vmem, size = 0x4000, scoped, tag = 'scratch operand']
  %s0 = inlined_call_operand.hbm [shape: f32[2,4,256], index: 0, kind: input, shape index: {}]
  %s1 = inlined_call_operand.hbm [shape: f32[2,3,256], index: 1, kind: input, shape index: {}]
  %s2 = inlined_call_operand.hbm [shape: f32[9,4,7], index: 2, kind: input, shape index: {}]
  %s3 = inlined_call_operand.hbm [shape: f32[4,1], index: 3, kind: input, shape index: {}]
  %s4 = inlined_call_operand.hbm [shape: f32[2,256], index: 4, kind: input, shape index: {}]
  %s5 = inlined_call_operand.hbm [shape: f32[2,4,256], index: 5, kind: output, shape index: {}]
  %s6 = sld [smem:[#allocation0]]
  $region73: #{tpu_custom_call.1} parent=0
    _
  %s8 = ssub.s32 1, %s6
  %s9 = scalar_select 0, %s8, %s6
  $region1: #{tpu_custom_call.1} parent=0
    #allocation3 [shape = 'u8[8192]{0}', space=vmem, size = 0x2000, scoped, tag = 'input window, operand 0']
    #allocation4 [shape = 's32[2]{0}', space=sflag, size = 0x8, scoped, tag = 'scoped memory for tpu_custom_call.1']
    #allocation5 [shape = 's32[2]{0}', space=sflag, size = 0x8, scoped, tag = 'scoped memory for tpu_custom_call.1']
    #allocation6 [shape = 'u8[8192]{0}', space=vmem, size = 0x2000, scoped, tag = 'input window, operand 1']
    #allocation7 [shape = 's32[2]{0}', space=sflag, size = 0x8, scoped, tag = 'scoped memory for tpu_custom_call.1']
    #allocation8 [shape = 'u8[18432]{0}', space=vmem, size = 0x4800, scoped, tag = 'input window, operand 2, single buffered']
    #allocation9 [shape = 'u8[2048]{0}', space=vmem, size = 0x800, scoped, tag = 'input window, operand 3, single buffered']
    #allocation10 [shape = 's32[1]{0}', space=sflag, size = 0x4, scoped, tag = 'scoped memory for tpu_custom_call.1']
    #allocation11 [shape = 'u8[2048]{0}', space=vmem, size = 0x800, scoped, tag = 'input window, operand 4, single buffered']
    #allocation12 [shape = 'u8[8192]{0}', space=vmem, size = 0x2000, scoped, tag = 'output window, operand 0']
    %10 = vsyncpa [#allocation4], 0
    %s11 = scalar_lea.sflag [#allocation4], 1
    %12 = vsyncpa %s11, 0
    %13 = vsyncpa [#allocation7], 0
    %s14 = scalar_lea.sflag [#allocation7], 1
    %15 = vsyncpa %s14, 0
    %16 = vsyncpa [#allocation10], 0
    %17 = vsyncpa [#allocation5], 0
    %s18 = scalar_lea.sflag [#allocation5], 1
    %19 = vsyncpa %s18, 0
    loop: start=0, step=1, limit=4
    $region2: #{tpu_custom_call.1} parent=1 // loop_pre_header
      _
    $region3: #{tpu_custom_call.1} parent=1 // loop_header
      %s21 = sphi 0, %s25
      %p22 = scmp.ge.s32.totalorder %s21, 4
      %s31 = sphi 0, %s33
      %s34 = sphi 0, %s31
      %s35 = sphi 0, %s34
      %s51 = sphi 0, %s35
      %s57 = sphi 0, %s59
      %s60 = sphi 0, %s57
      %s61 = sphi 0, %s60
      %s77 = sphi 0, %s61
      %s81 = sphi 0, %s81
      %s83 = sphi 0, %s81
      %s84 = sphi 0, %s83
      %s98 = sphi 0, %s84
      %s102 = sphi 0, %s102
      %s104 = sphi 0, %s102
      %s105 = sphi 0, %s104
      %s119 = sphi 0, %s105
      %s123 = sphi 0, %s123
      %s125 = sphi 0, %s123
      %s126 = sphi 0, %s125
      %s140 = sphi 0, %s126
      %s146 = sphi 0, %s148
      %s149 = sphi 0, %s146
      %s150 = sphi 0, %s149
      %s166 = sphi 0, %s150
    $region4: #{tpu_custom_call.1} parent=1 // loop_header_branch
      %24 = sbr.rel (%p22) target = $region8
    $region5: #{tpu_custom_call.1} parent=1 // loop_body
      %s26 = ssub.s32 %s21, 1
      %s27 = ssub.s32 %s21, 2
      %s28 = sadd.s32 %s21, 1
      %s29 = ssub.s32 %s21, %s28
      %p30 = scmp.eq.s32.totalorder %s29, 0
      %s32 = sadd.s32 %s31, 1
      %s33 = scalar_select %p30, %s31, %s32
      %p36 = pneg %p30
      %p37 = scmp.eq.s32.totalorder %s21, 1
      %p38 = por %p36, %p37
      %p39 = scmp.ne.s32.totalorder %s31, %s34
      %p40 = scmp.eq.s32.totalorder %s21, 0
      %p41 = por %p39, %p40
      %p42 = scmp.ne.s32.totalorder %s31, %s34
      %p43 = scmp.eq.s32.totalorder %s26, 1
      %p44 = por %p42, %p43
      %p45 = scmp.ne.s32.totalorder %s34, %s35
      %p46 = scmp.eq.s32.totalorder %s26, 0
      %p47 = por %p45, %p46
      %p48 = scmp.ne.s32.totalorder %s34, %s35
      %p49 = scmp.eq.s32.totalorder %s27, 1
      %p50 = por %p48, %p49
      %p52 = scmp.ne.s32.totalorder %s35, %s51
      %p53 = scmp.eq.s32.totalorder %s27, 0
      %p54 = por %p52, %p53
      %s55 = ssub.s32 %s21, %s28
      %p56 = scmp.eq.s32.totalorder %s55, 0
      %s58 = sadd.s32 %s57, 1
      %s59 = scalar_select %p56, %s57, %s58
      %p62 = pneg %p56
      %p63 = scmp.eq.s32.totalorder %s21, 1
      %p64 = por %p62, %p63
      %p65 = scmp.ne.s32.totalorder %s57, %s60
      %p66 = scmp.eq.s32.totalorder %s21, 0
      %p67 = por %p65, %p66
      %p68 = scmp.ne.s32.totalorder %s57, %s60
      %p69 = scmp.eq.s32.totalorder %s26, 1
      %p70 = por %p68, %p69
      %p71 = scmp.ne.s32.totalorder %s60, %s61
      %p72 = scmp.eq.s32.totalorder %s26, 0
      %p73 = por %p71, %p72
      %p74 = scmp.ne.s32.totalorder %s60, %s61
      %p75 = scmp.eq.s32.totalorder %s27, 1
      %p76 = por %p74, %p75
      %p78 = scmp.ne.s32.totalorder %s61, %s77
      %p79 = scmp.eq.s32.totalorder %s27, 0
      %p80 = por %p78, %p79
      %s82 = sadd.s32 %s81, 1
      %p85 = scmp.eq.s32.totalorder %s21, 1
      %p86 = scmp.ne.s32.totalorder %s81, %s83
      %p87 = scmp.eq.s32.totalorder %s21, 0
      %p88 = por %p86, %p87
      %p89 = scmp.ne.s32.totalorder %s81, %s83
      %p90 = scmp.eq.s32.totalorder %s26, 1
      %p91 = por %p89, %p90
      %p92 = scmp.ne.s32.totalorder %s83, %s84
      %p93 = scmp.eq.s32.totalorder %s26, 0
      %p94 = por %p92, %p93
      %p95 = scmp.ne.s32.totalorder %s83, %s84
      %p96 = scmp.eq.s32.totalorder %s27, 1
      %p97 = por %p95, %p96
      %p99 = scmp.ne.s32.totalorder %s84, %s98
      %p100 = scmp.eq.s32.totalorder %s27, 0
      %p101 = por %p99, %p100
      %s103 = sadd.s32 %s102, 1
      %p106 = scmp.eq.s32.totalorder %s21, 1
      %p107 = scmp.ne.s32.totalorder %s102, %s104
      %p108 = scmp.eq.s32.totalorder %s21, 0
      %p109 = por %p107, %p108
      %p110 = scmp.ne.s32.totalorder %s102, %s104
      %p111 = scmp.eq.s32.totalorder %s26, 1
      %p112 = por %p110, %p111
      %p113 = scmp.ne.s32.totalorder %s104, %s105
      %p114 = scmp.eq.s32.totalorder %s26, 0
      %p115 = por %p113, %p114
      %p116 = scmp.ne.s32.totalorder %s104, %s105
      %p117 = scmp.eq.s32.totalorder %s27, 1
      %p118 = por %p116, %p117
      %p120 = scmp.ne.s32.totalorder %s105, %s119
      %p121 = scmp.eq.s32.totalorder %s27, 0
      %p122 = por %p120, %p121
      %s124 = sadd.s32 %s123, 1
      %p127 = scmp.eq.s32.totalorder %s21, 1
      %p128 = scmp.ne.s32.totalorder %s123, %s125
      %p129 = scmp.eq.s32.totalorder %s21, 0
      %p130 = por %p128, %p129
      %p131 = scmp.ne.s32.totalorder %s123, %s125
      %p132 = scmp.eq.s32.totalorder %s26, 1
      %p133 = por %p131, %p132
      %p134 = scmp.ne.s32.totalorder %s125, %s126
      %p135 = scmp.eq.s32.totalorder %s26, 0
      %p136 = por %p134, %p135
      %p137 = scmp.ne.s32.totalorder %s125, %s126
      %p138 = scmp.eq.s32.totalorder %s27, 1
      %p139 = por %p137, %p138
      %p141 = scmp.ne.s32.totalorder %s126, %s140
      %p142 = scmp.eq.s32.totalorder %s27, 0
      %p143 = por %p141, %p142
      %s144 = ssub.s32 %s21, %s28
      %p145 = scmp.eq.s32.totalorder %s144, 0
      %s147 = sadd.s32 %s146, 1
      %s148 = scalar_select %p145, %s146, %s147
      %p151 = pneg %p145
      %p152 = scmp.eq.s32.totalorder %s21, 1
      %p153 = por %p151, %p152
      %p154 = scmp.ne.s32.totalorder %s146, %s149
      %p155 = scmp.eq.s32.totalorder %s21, 0
      %p156 = por %p154, %p155
      %p157 = scmp.ne.s32.totalorder %s146, %s149
      %p158 = scmp.eq.s32.totalorder %s26, 1
      %p159 = por %p157, %p158
      %p160 = scmp.ne.s32.totalorder %s149, %s150
      %p161 = scmp.eq.s32.totalorder %s26, 0
      %p162 = por %p160, %p161
      %p163 = scmp.ne.s32.totalorder %s149, %s150
      %p164 = scmp.eq.s32.totalorder %s27, 1
      %p165 = por %p163, %p164
      %p167 = scmp.ne.s32.totalorder %s150, %s166
      %p168 = scmp.eq.s32.totalorder %s27, 0
      %p169 = por %p167, %p168
      %p170 = scmp.le.s32.totalorder 1, %s21
      %p171 = scmp.lt.s32.totalorder %s21, 3
      %p172 = pnand %p170, %p171
      %p173 = pneg %p172
      // Predicated region
      $region9: #{tpu_custom_call.1} parent=5 // pred_check
        _
      $region10: #{tpu_custom_call.1} parent=5 // pred_check_branch
        %175 = sbr.rel (%p172) target = $region12
      $region11: #{tpu_custom_call.1} parent=5 // pred_region
        %s176 = ssub.s32 %s21, 1
        // Predicated region
        $region13: #{tpu_custom_call.1} parent=11 // pred_check
          %p177 = pneg %p94
        $region14: #{tpu_custom_call.1} parent=11 // pred_check_branch
          %179 = sbr.rel (%p177) target = $region16
        $region15: #{tpu_custom_call.1} parent=11 // pred_region
          %s181 = ssub.s32 576, 576
          %182 = vsyncadd [#allocation7], %s181
          %s183 = sshll.u32 [#allocation8], 4
          %s184 = int_to_ptr.vmem [resolvable:$true] %s183
          %189 = dma.hbm_to_vmem [thread:$0]  %s2, 576, %s184, [#allocation7], 64, 64, 4
        $region16: #{tpu_custom_call.1} parent=11 // pred_fallthru
          _
        // Predicated region
        $region17: #{tpu_custom_call.1} parent=11 // pred_check
          %p190 = pneg %p115
        $region18: #{tpu_custom_call.1} parent=11 // pred_check_branch
          %192 = sbr.rel (%p190) target = $region20
        $region19: #{tpu_custom_call.1} parent=11 // pred_region
          %s194 = ssub.s32 64, 64
          %195 = vsyncadd [#allocation10], %s194
          %s197 = sshll.u32 [#allocation9], 4
          %s198 = int_to_ptr.vmem [resolvable:$true] %s197
          %200 = dma.hbm_to_vmem [thread:$0]  %s3, 64, %s198, [#allocation10]
        $region20: #{tpu_custom_call.1} parent=11 // pred_fallthru
          _
        // Predicated region
        $region21: #{tpu_custom_call.1} parent=11 // pred_check
          %p201 = pneg %p136
        $region22: #{tpu_custom_call.1} parent=11 // pred_check_branch
          %203 = sbr.rel (%p201) target = $region24
        $region23: #{tpu_custom_call.1} parent=11 // pred_region
          %s205 = ssub.s32 64, 64
          %206 = vsyncadd [#allocation10], %s205
          %s208 = sshll.u32 [#allocation11], 4
          %s209 = int_to_ptr.vmem [resolvable:$true] %s208
          %211 = dma.hbm_to_vmem [thread:$0]  %s4, 64, %s209, [#allocation10]
        $region24: #{tpu_custom_call.1} parent=11 // pred_fallthru
          _
      $region12: #{tpu_custom_call.1} parent=5 // pred_fallthru
        _
      %p212 = scmp.lt.s32.totalorder %s21, 2
      // Predicated region
      $region25: #{tpu_custom_call.1} parent=5 // pred_check
        %p213 = pneg %p212
      $region26: #{tpu_custom_call.1} parent=5 // pred_check_branch
        %215 = sbr.rel (%p213) target = $region28
      $region27: #{tpu_custom_call.1} parent=5 // pred_region
        // Predicated region
        $region29: #{tpu_custom_call.1} parent=27 // pred_check
          %p216 = pneg %p41
        $region30: #{tpu_custom_call.1} parent=27 // pred_check_branch
          %218 = sbr.rel (%p216) target = $region32
        $region31: #{tpu_custom_call.1} parent=27 // pred_region
          %s219 = sand.u32 %s31, 1
          %s220 = scalar_lea.sflag [#allocation4], %s219
          %s221 = sand.u32 %s31, 1
          %s222 = smul.addr %s221, 8
          %s223 = scalar_lea.vmem [#allocation3], %s222
          %s225 = ssub.s32 128, 128
          %226 = vsyncadd %s220, %s225
          %s227 = smul.addr %s21, 2
          %s228 = smul.addr %s227, 64
          %s229 = scalar_lea.hbm %s0, %s228
          %s231 = sshll.u32 %s223, 4
          %s232 = int_to_ptr.vmem [resolvable:$true] %s231
          %234 = dma.hbm_to_vmem [thread:$0]  %s229, 128, %s232, %s220
        $region32: #{tpu_custom_call.1} parent=27 // pred_fallthru
          _
        // Predicated region
        $region33: #{tpu_custom_call.1} parent=27 // pred_check
          %p235 = pneg %p67
        $region34: #{tpu_custom_call.1} parent=27 // pred_check_branch
          %237 = sbr.rel (%p235) target = $region36
        $region35: #{tpu_custom_call.1} parent=27 // pred_region
          %s238 = sand.u32 %s21, 1
          %s239 = scalar_lea.sflag [#allocation7], %s238
          %s240 = sand.u32 %s57, 1
          %s241 = smul.addr %s240, 8
          %s242 = scalar_lea.vmem [#allocation6], %s241
          %s244 = ssub.s32 128, 128
          %245 = vsyncadd %s239, %s244
          %s246 = smul.addr %s21, 2
          %s247 = smul.addr %s246, 64
          %s248 = scalar_lea.hbm %s1, %s247
          %s250 = sshll.u32 %s242, 4
          %s251 = int_to_ptr.vmem [resolvable:$true] %s250
          %253 = dma.hbm_to_vmem [thread:$0]  %s248, 128, %s251, %s239
        $region36: #{tpu_custom_call.1} parent=27 // pred_fallthru
          _
      $region28: #{tpu_custom_call.1} parent=5 // pred_fallthru
        _
      %p254 = scmp.le.s32.totalorder 1, %s21
      %p255 = scmp.lt.s32.totalorder %s21, 3
      %p256 = pnand %p254, %p255
      %p257 = pneg %p256
      // Predicated region
      $region37: #{tpu_custom_call.1} parent=5 // pred_check
        _
      $region38: #{tpu_custom_call.1} parent=5 // pred_check_branch
        %259 = sbr.rel (%p256) target = $region40
      $region39: #{tpu_custom_call.1} parent=5 // pred_region
        %s260 = ssub.s32 %s21, 1
        %s261 = sand.u32 %s34, 1
        %s262 = scalar_lea.sflag [#allocation4], %s261
        %s263 = sand.u32 %s34, 1
        %s264 = smul.addr %s263, 8
        %s265 = scalar_lea.vmem [#allocation3], %s264
        // Predicated region
        $region41: #{tpu_custom_call.1} parent=39 // pred_check
          %p266 = pneg %p47
        $region42: #{tpu_custom_call.1} parent=39 // pred_check_branch
          %268 = sbr.rel (%p266) target = $region44
        $region43: #{tpu_custom_call.1} parent=39 // pred_region
          %269 = dma.done %s262, 128
        $region44: #{tpu_custom_call.1} parent=39 // pred_fallthru
          _
        %s270 = sand.u32 %s26, 1
        %s271 = scalar_lea.sflag [#allocation7], %s270
        %s272 = sand.u32 %s60, 1
        %s273 = smul.addr %s272, 8
        %s274 = scalar_lea.vmem [#allocation6], %s273
        // Predicated region
        $region45: #{tpu_custom_call.1} parent=39 // pred_check
          %p275 = pneg %p73
        $region46: #{tpu_custom_call.1} parent=39 // pred_check_branch
          %277 = sbr.rel (%p275) target = $region48
        $region47: #{tpu_custom_call.1} parent=39 // pred_region
          %278 = dma.done %s271, 128
        $region48: #{tpu_custom_call.1} parent=39 // pred_fallthru
          _
        // Predicated region
        $region49: #{tpu_custom_call.1} parent=39 // pred_check
          %p279 = pneg %p94
        $region50: #{tpu_custom_call.1} parent=39 // pred_check_branch
          %281 = sbr.rel (%p279) target = $region52
        $region51: #{tpu_custom_call.1} parent=39 // pred_region
          %282 = dma.done [#allocation7], 576
        $region52: #{tpu_custom_call.1} parent=39 // pred_fallthru
          _
        // Predicated region
        $region53: #{tpu_custom_call.1} parent=39 // pred_check
          %p283 = pneg %p115
        $region54: #{tpu_custom_call.1} parent=39 // pred_check_branch
          %285 = sbr.rel (%p283) target = $region56
        $region55: #{tpu_custom_call.1} parent=39 // pred_region
          %286 = dma.done [#allocation10], 64
        $region56: #{tpu_custom_call.1} parent=39 // pred_fallthru
          _
        // Predicated region
        $region57: #{tpu_custom_call.1} parent=39 // pred_check
          %p287 = pneg %p136
        $region58: #{tpu_custom_call.1} parent=39 // pred_check_branch
          %289 = sbr.rel (%p287) target = $region60
        $region59: #{tpu_custom_call.1} parent=39 // pred_region
          %290 = dma.done [#allocation10], 64
        $region60: #{tpu_custom_call.1} parent=39 // pred_fallthru
          _
        %s291 = sand.u32 %s34, 1
        %s292 = scalar_lea.sflag [#allocation4], %s291
        %s293 = sand.u32 %s34, 1
        %s294 = smul.addr %s293, 8
        %s295 = scalar_lea.vmem [#allocation3], %s294
        %p296 = pneg %p47
        %p297 = pneg %p44
        %s298 = sand.u32 %s26, 1
        %s299 = scalar_lea.sflag [#allocation7], %s298
        %s300 = sand.u32 %s60, 1
        %s301 = smul.addr %s300, 8
        %s302 = scalar_lea.vmem [#allocation6], %s301
        %p303 = pneg %p73
        %p304 = pneg %p70
        %p305 = pneg %p94
        %p306 = pneg %p91
        %p307 = pneg %p115
        %p308 = pneg %p112
        %p309 = pneg %p136
        %p310 = pneg %p133
        %p311 = pneg %p162
        %p312 = pneg %p159
        %s313 = sand.u32 %s149, 1
        %s314 = scalar_lea.sflag [#allocation5], %s313
        %s315 = sand.u32 %s149, 1
        %s316 = smul.addr %s315, 8
        %s317 = scalar_lea.vmem [#allocation12], %s316
        %318 = vst [vmem:[#allocation2] sm:$0x7f] 0.0
        %vm319 = vcmask 137216
        %320 = vst.msk [vmem:[#allocation2 + $0x18] sm:$0x7f] %vm319, 0.0
        %v321 = vld [vmem:[%s265] sm:$0xff]
        %v323 = vcombine.high %v321, %v321
        %325 = vst [vmem:[#allocation2 + $0x8] sm:$0xf] %v321
        %326 = vst [vmem:[#allocation2 + $0x10] sm:$0xf] %v323
        %v327 = vld [vmem:[%s274] sm:$0x77]
        %v329 = vcombine.low %v327, %v327
        %331 = vst [vmem:[#allocation2 + $0x8] sm:$0x70] %v329
        %332 = vst [vmem:[#allocation2 + $0x10] sm:$0x70] %v327
        %v333 = vld [vmem:[#allocation11] sm:$0xf]
        %v334 = vld [vmem:[#allocation2] sm:$0x7f]
        %v335 = vld [vmem:[#allocation2 + $0x8] sm:$0x7f]
        %v336 = vld [vmem:[#allocation2 + $0x10] sm:$0x7f]
        %v338 = vlaneseq
        %v339 = vshrl.u32 %v338, 7
        %v340 = vsub.s32 0, %v339
        %v341 = vrot.slane %v333, %v340
        %v342 = vlaneseq
        %v343 = vshrl.u32 %v342, 7
        %v344 = vsub.s32 2, %v343
        %v345 = vrot.slane %v333, %v344
        %v348 = vlaneseq
        %v349 = vshrl.u32 %v348, 7
        %v350 = vsub.s32 0, %v349
        %v351 = vrot.slane %v341, %v350
        %v352 = vlaneseq
        %v353 = vshrl.u32 %v352, 7
        %v354 = vsub.s32 0, %v353
        %v355 = vrot.slane %v345, %v354
        %358 = vrot.lane.b32.xlu0 %v351, 111
        %v359 = vpop.permute.xlu0 %358
        %360 = vrot.lane.b32.xlu0 %v355, 111
        %v361 = vpop.permute.xlu0 %360
        %vm362 = vcmask 908288
        %v363 = vsel %vm362, %v359, %v361
        %v367 = vmul.f32 %v334, %v359
        %v368 = vmul.f32 %v335, %v363
        %v369 = vmul.f32 %v336, %v361
        %v370 = vld [vmem:[#allocation8] sm:$0xf]
        %s371 = scalar_lea.vmem [#allocation8], 4
        %v372 = vld [vmem:[%s371] sm:$0xf]
        %376 = vrot.lane.b32.xlu0 %v334, 16
        %v377 = vpop.permute.xlu0 %376
        %378 = vrot.lane.b32.xlu0 %v335, 16
        %v379 = vpop.permute.xlu0 %378
        %380 = vrot.lane.b32.xlu0 %v336, 16
        %v381 = vpop.permute.xlu0 %380
        %vm382 = vcmask 130048
        %v383 = vsel %vm382, %v377, %v379
        %v384 = vsel %vm382, %v379, %v381
        %vm385 = vcmask 56320
        %v387 = vsel %vm385, %v372, 0
        %vm389 = vcmask 1046528
        %v390 = vsel %vm389, %v383, 0
        %v392 = vsel %vm389, %v384, 0
        %394 = vmatprep.subr.mxu0 %v392
        %395 = vmatpush1.msra.mxu0 %v390
        %396 = vmatprep.subr.mxu0 0.0
        %397 = vmatpush1.msra.mxu0 0.0
        %398 = vmatprep.subr.mxu0 0.0
        %399 = vmatpush1.msra.mxu0 0.0
        %400 = vmatprep.subr.mxu0 0.0
        %401 = vmatpush1.msra.mxu0 0.0
        %402 = vmatprep.subr.mxu0 0.0
        %403 = vmatpush1.msra.mxu0 0.0
        %404 = vmatprep.subr.mxu0 0.0
        %405 = vmatpush1.msra.mxu0 0.0
        %406 = vmatprep.subr.mxu0 0.0
        %407 = vmatpush1.msra.mxu0 0.0
        %408 = vmatprep.subr.mxu0 0.0
        %409 = vmatpush1.msra.mxu0 0.0
        %410 = vmatprep.subr.mxu0 0.0
        %411 = vmatpush1.msra.mxu0 0.0
        %412 = vmatprep.subr.mxu0 0.0
        %413 = vmatpush1.msra.mxu0 0.0
        %414 = vmatprep.subr.mxu0 0.0
        %415 = vmatpush1.msra.mxu0 0.0
        %416 = vmatprep.subr.mxu0 0.0
        %417 = vmatpush1.msra.mxu0 0.0
        %418 = vmatprep.subr.mxu0 0.0
        %419 = vmatpush1.msra.mxu0 0.0
        %420 = vmatprep.subr.mxu0 0.0
        %421 = vmatpush1.msra.mxu0 0.0
        %422 = vmatprep.subr.mxu0 0.0
        %423 = vmatpush1.msra.mxu0 0.0
        %424 = vmatprep.subr.mxu0 0.0
        %425 = vmatpush1.msra.mxu0 0.0
        %426 = vmatprep.subr.mxu0 0.0
        %427 = vmatpush1.msra.mxu0 0.0
        %428 = vmatprep.subr.mxu0 0.0
        %429 = vmatpush1.msra.mxu0 0.0
        %430 = vmatprep.subr.mxu0 0.0
        %431 = vmatpush1.msra.mxu0 0.0
        %432 = vmatprep.subr.mxu0 0.0
        %433 = vmatpush1.msra.mxu0 0.0
        %434 = vmatprep.subr.mxu0 0.0
        %435 = vmatpush1.msra.mxu0 0.0
        %436 = vmatprep.subr.mxu0 0.0
        %437 = vmatpush1.msra.mxu0 0.0
        %438 = vmatprep.subr.mxu0 0.0
        %439 = vmatpush1.msra.mxu0 0.0
        %440 = vmatprep.subr.mxu0 0.0
        %441 = vmatpush1.msra.mxu0 0.0
        %442 = vmatprep.subr.mxu0 0.0
        %443 = vmatpush1.msra.mxu0 0.0
        %444 = vmatprep.subr.mxu0 0.0
        %445 = vmatpush1.msra.mxu0 0.0
        %446 = vmatprep.subr.mxu0 0.0
        %447 = vmatpush1.msra.mxu0 0.0
        %448 = vmatprep.subr.mxu0 0.0
        %449 = vmatpush1.msra.mxu0 0.0
        %450 = vmatprep.subr.mxu0 0.0
        %451 = vmatpush1.msra.mxu0 0.0
        %452 = vmatprep.subr.mxu0 0.0
        %453 = vmatpush1.msra.mxu0 0.0
        %454 = vmatprep.subr.mxu0 0.0
        %455 = vmatpush1.msra.mxu0 0.0
        %456 = vmatprep.subr.mxu0 0.0
        %457 = vmatpush1.msra.mxu0 0.0
        %458 = vmatprep.mubr.f32.mxu0 0.0
        %459 = vmatmul.mubr.f32.gmra.mrb[0].mxu0 %v387
        %v460 = vpop.f32.mrb[0].mxu0
        %v461 = vadd.f32 0.0, %v460
        %v462 = vpop.f32.mrb[0].mxu0
        %v463 = vadd.f32 0.0, %v462
        %464 = vdwg.mxu0
        %468 = vrot.lane.b32.xlu0 %v367, 17
        %v469 = vpop.permute.xlu0 %468
        %470 = vrot.lane.b32.xlu0 %v368, 17
        %v471 = vpop.permute.xlu0 %470
        %472 = vrot.lane.b32.xlu0 %v369, 17
        %v473 = vpop.permute.xlu0 %472
        %vm474 = vcmask 138240
        %v475 = vsel %vm474, %v469, %v471
        %v476 = vsel %vm474, %v471, %v473
        %v478 = vsel %vm385, %v370, 0
        %v480 = vsel %vm389, %v475, 0
        %v482 = vsel %vm389, %v476, 0
        %484 = vmatprep.subr.mxu0 %v482
        %485 = vmatpush1.msra.mxu0 %v480
        %486 = vmatprep.subr.mxu0 0.0
        %487 = vmatpush1.msra.mxu0 0.0
        %488 = vmatprep.subr.mxu0 0.0
        %489 = vmatpush1.msra.mxu0 0.0
        %490 = vmatprep.subr.mxu0 0.0
        %491 = vmatpush1.msra.mxu0 0.0
        %492 = vmatprep.subr.mxu0 0.0
        %493 = vmatpush1.msra.mxu0 0.0
        %494 = vmatprep.subr.mxu0 0.0
        %495 = vmatpush1.msra.mxu0 0.0
        %496 = vmatprep.subr.mxu0 0.0
        %497 = vmatpush1.msra.mxu0 0.0
        %498 = vmatprep.subr.mxu0 0.0
        %499 = vmatpush1.msra.mxu0 0.0
        %500 = vmatprep.subr.mxu0 0.0
        %501 = vmatpush1.msra.mxu0 0.0
        %502 = vmatprep.subr.mxu0 0.0
        %503 = vmatpush1.msra.mxu0 0.0
        %504 = vmatprep.subr.mxu0 0.0
        %505 = vmatpush1.msra.mxu0 0.0
        %506 = vmatprep.subr.mxu0 0.0
        %507 = vmatpush1.msra.mxu0 0.0
        %508 = vmatprep.subr.mxu0 0.0
        %509 = vmatpush1.msra.mxu0 0.0
        %510 = vmatprep.subr.mxu0 0.0
        %511 = vmatpush1.msra.mxu0 0.0
        %512 = vmatprep.subr.mxu0 0.0
        %513 = vmatpush1.msra.mxu0 0.0
        %514 = vmatprep.subr.mxu0 0.0
        %515 = vmatpush1.msra.mxu0 0.0
        %516 = vmatprep.subr.mxu0 0.0
        %517 = vmatpush1.msra.mxu0 0.0
        %518 = vmatprep.subr.mxu0 0.0
        %519 = vmatpush1.msra.mxu0 0.0
        %520 = vmatprep.subr.mxu0 0.0
        %521 = vmatpush1.msra.mxu0 0.0
        %522 = vmatprep.subr.mxu0 0.0
        %523 = vmatpush1.msra.mxu0 0.0
        %524 = vmatprep.subr.mxu0 0.0
        %525 = vmatpush1.msra.mxu0 0.0
        %526 = vmatprep.subr.mxu0 0.0
        %527 = vmatpush1.msra.mxu0 0.0
        %528 = vmatprep.subr.mxu0 0.0
        %529 = vmatpush1.msra.mxu0 0.0
        %530 = vmatprep.subr.mxu0 0.0
        %531 = vmatpush1.msra.mxu0 0.0
        %532 = vmatprep.subr.mxu0 0.0
        %533 = vmatpush1.msra.mxu0 0.0
        %534 = vmatprep.subr.mxu0 0.0
        %535 = vmatpush1.msra.mxu0 0.0
        %536 = vmatprep.subr.mxu0 0.0
        %537 = vmatpush1.msra.mxu0 0.0
        %538 = vmatprep.subr.mxu0 0.0
        %539 = vmatpush1.msra.mxu0 0.0
        %540 = vmatprep.subr.mxu0 0.0
        %541 = vmatpush1.msra.mxu0 0.0
        %542 = vmatprep.subr.mxu0 0.0
        %543 = vmatpush1.msra.mxu0 0.0
        %544 = vmatprep.subr.mxu0 0.0
        %545 = vmatpush1.msra.mxu0 0.0
        %546 = vmatprep.subr.mxu0 0.0
        %547 = vmatpush1.msra.mxu0 0.0
        %548 = vmatprep.mubr.f32.mxu0 0.0
        %549 = vmatmul.mubr.f32.gmra.mrb[0].mxu0 %v478
        %v550 = vpop.f32.mrb[0].mxu0
        %v551 = vadd.f32 %v461, %v550
        %v552 = vpop.f32.mrb[0].mxu0
        %v553 = vadd.f32 %v463, %v552
        %554 = vdwg.mxu0
        %v555 = vlaneseq
        %v556 = vshrl.u32 %v555, 7
        %v557 = vsub.s32 1, %v556
        %v558 = vrot.slane %v333, %v557
        %v559 = vlaneseq
        %v560 = vshrl.u32 %v559, 7
        %v561 = vsub.s32 3, %v560
        %v562 = vrot.slane %v333, %v561
        %v565 = vlaneseq
        %v566 = vshrl.u32 %v565, 7
        %v567 = vsub.s32 1, %v566
        %v568 = vrot.slane %v558, %v567
        %v569 = vlaneseq
        %v570 = vshrl.u32 %v569, 7
        %v571 = vsub.s32 1, %v570
        %v572 = vrot.slane %v562, %v571
        %575 = vrot.lane.b32.xlu0 %v568, 113
        %v576 = vpop.permute.xlu0 %575
        %577 = vrot.lane.b32.xlu0 %v572, 113
        %v578 = vpop.permute.xlu0 %577
        %vm579 = vcmask 924672
        %v580 = vsel %vm579, %v576, %v578
        %v584 = vmul.f32 %v334, %v576
        %v585 = vmul.f32 %v335, %v580
        %v586 = vmul.f32 %v336, %v578
        %s587 = scalar_lea.vmem [#allocation8], 8
        %v588 = vld [vmem:[%s587] sm:$0xf]
        %592 = vrot.lane.b32.xlu0 %v584, 15
        %v593 = vpop.permute.xlu0 %592
        %594 = vrot.lane.b32.xlu0 %v585, 15
        %v595 = vpop.permute.xlu0 %594
        %596 = vrot.lane.b32.xlu0 %v586, 15
        %v597 = vpop.permute.xlu0 %596
        %vm598 = vcmask 121856
        %v599 = vsel %vm598, %v593, %v595
        %v600 = vsel %vm598, %v595, %v597
        %v602 = vsel %vm385, %v588, 0
        %v604 = vsel %vm389, %v599, 0
        %v606 = vsel %vm389, %v600, 0
        %608 = vmatprep.subr.mxu0 %v606
        %609 = vmatpush1.msra.mxu0 %v604
        %610 = vmatprep.subr.mxu0 0.0
        %611 = vmatpush1.msra.mxu0 0.0
        %612 = vmatprep.subr.mxu0 0.0
        %613 = vmatpush1.msra.mxu0 0.0
        %614 = vmatprep.subr.mxu0 0.0
        %615 = vmatpush1.msra.mxu0 0.0
        %616 = vmatprep.subr.mxu0 0.0
        %617 = vmatpush1.msra.mxu0 0.0
        %618 = vmatprep.subr.mxu0 0.0
        %619 = vmatpush1.msra.mxu0 0.0
        %620 = vmatprep.subr.mxu0 0.0
        %621 = vmatpush1.msra.mxu0 0.0
        %622 = vmatprep.subr.mxu0 0.0
        %623 = vmatpush1.msra.mxu0 0.0
        %624 = vmatprep.subr.mxu0 0.0
        %625 = vmatpush1.msra.mxu0 0.0
        %626 = vmatprep.subr.mxu0 0.0
        %627 = vmatpush1.msra.mxu0 0.0
        %628 = vmatprep.subr.mxu0 0.0
        %629 = vmatpush1.msra.mxu0 0.0
        %630 = vmatprep.subr.mxu0 0.0
        %631 = vmatpush1.msra.mxu0 0.0
        %632 = vmatprep.subr.mxu0 0.0
        %633 = vmatpush1.msra.mxu0 0.0
        %634 = vmatprep.subr.mxu0 0.0
        %635 = vmatpush1.msra.mxu0 0.0
        %636 = vmatprep.subr.mxu0 0.0
        %637 = vmatpush1.msra.mxu0 0.0
        %638 = vmatprep.subr.mxu0 0.0
        %639 = vmatpush1.msra.mxu0 0.0
        %640 = vmatprep.subr.mxu0 0.0
        %641 = vmatpush1.msra.mxu0 0.0
        %642 = vmatprep.subr.mxu0 0.0
        %643 = vmatpush1.msra.mxu0 0.0
        %644 = vmatprep.subr.mxu0 0.0
        %645 = vmatpush1.msra.mxu0 0.0
        %646 = vmatprep.subr.mxu0 0.0
        %647 = vmatpush1.msra.mxu0 0.0
        %648 = vmatprep.subr.mxu0 0.0
        %649 = vmatpush1.msra.mxu0 0.0
        %650 = vmatprep.subr.mxu0 0.0
        %651 = vmatpush1.msra.mxu0 0.0
        %652 = vmatprep.subr.mxu0 0.0
        %653 = vmatpush1.msra.mxu0 0.0
        %654 = vmatprep.subr.mxu0 0.0
        %655 = vmatpush1.msra.mxu0 0.0
        %656 = vmatprep.subr.mxu0 0.0
        %657 = vmatpush1.msra.mxu0 0.0
        %658 = vmatprep.subr.mxu0 0.0
        %659 = vmatpush1.msra.mxu0 0.0
        %660 = vmatprep.subr.mxu0 0.0
        %661 = vmatpush1.msra.mxu0 0.0
        %662 = vmatprep.subr.mxu0 0.0
        %663 = vmatpush1.msra.mxu0 0.0
        %664 = vmatprep.subr.mxu0 0.0
        %665 = vmatpush1.msra.mxu0 0.0
        %666 = vmatprep.subr.mxu0 0.0
        %667 = vmatpush1.msra.mxu0 0.0
        %668 = vmatprep.subr.mxu0 0.0
        %669 = vmatpush1.msra.mxu0 0.0
        %670 = vmatprep.subr.mxu0 0.0
        %671 = vmatpush1.msra.mxu0 0.0
        %672 = vmatprep.mubr.f32.mxu0 0.0
        %673 = vmatmul.mubr.f32.gmra.mrb[0].mxu0 %v602
        %v674 = vpop.f32.mrb[0].mxu0
        %v675 = vadd.f32 0.0, %v674
        %v676 = vpop.f32.mrb[0].mxu0
        %v677 = vadd.f32 0.0, %v676
        %678 = vdwg.mxu0
        %v679 = vadd.f32 %v551, %v675
        %v680 = vadd.f32 %v553, %v677
        %681 = vrot.lane.b32.xlu0 %v351, 127
        %v682 = vpop.permute.xlu0 %681
        %683 = vrot.lane.b32.xlu0 %v355, 127
        %v684 = vpop.permute.xlu0 %683
        %vm685 = vcmask 1039360
        %v686 = vsel %vm685, %v682, %v684
        %v690 = vmul.f32 %v334, %v682
        %v691 = vmul.f32 %v335, %v686
        %v692 = vmul.f32 %v336, %v684
        %s693 = scalar_lea.vmem [#allocation8], 12
        %v694 = vld [vmem:[%s693] sm:$0xf]
        %698 = vrot.lane.b32.xlu0 %v690, 1
        %v699 = vpop.permute.xlu0 %698
        %700 = vrot.lane.b32.xlu0 %v691, 1
        %v701 = vpop.permute.xlu0 %700
        %702 = vrot.lane.b32.xlu0 %v692, 1
        %v703 = vpop.permute.xlu0 %702
        %vm704 = vcmask 7168
        %v705 = vsel %vm704, %v699, %v701
        %v706 = vsel %vm704, %v701, %v703
        %v708 = vsel %vm385, %v694, 0
        %v710 = vsel %vm389, %v705, 0
        %v712 = vsel %vm389, %v706, 0
        %714 = vmatprep.subr.mxu0 %v712
        %715 = vmatpush1.msra.mxu0 %v710
        %716 = vmatprep.subr.mxu0 0.0
        %717 = vmatpush1.msra.mxu0 0.0
        %718 = vmatprep.subr.mxu0 0.0
        %719 = vmatpush1.msra.mxu0 0.0
        %720 = vmatprep.subr.mxu0 0.0
        %721 = vmatpush1.msra.mxu0 0.0
        %722 = vmatprep.subr.mxu0 0.0
        %723 = vmatpush1.msra.mxu0 0.0
        %724 = vmatprep.subr.mxu0 0.0
        %725 = vmatpush1.msra.mxu0 0.0
        %726 = vmatprep.subr.mxu0 0.0
        %727 = vmatpush1.msra.mxu0 0.0
        %728 = vmatprep.subr.mxu0 0.0
        %729 = vmatpush1.msra.mxu0 0.0
        %730 = vmatprep.subr.mxu0 0.0
        %731 = vmatpush1.msra.mxu0 0.0
        %732 = vmatprep.subr.mxu0 0.0
        %733 = vmatpush1.msra.mxu0 0.0
        %734 = vmatprep.subr.mxu0 0.0
        %735 = vmatpush1.msra.mxu0 0.0
        %736 = vmatprep.subr.mxu0 0.0
        %737 = vmatpush1.msra.mxu0 0.0
        %738 = vmatprep.subr.mxu0 0.0
        %739 = vmatpush1.msra.mxu0 0.0
        %740 = vmatprep.subr.mxu0 0.0
        %741 = vmatpush1.msra.mxu0 0.0
        %742 = vmatprep.subr.mxu0 0.0
        %743 = vmatpush1.msra.mxu0 0.0
        %744 = vmatprep.subr.mxu0 0.0
        %745 = vmatpush1.msra.mxu0 0.0
        %746 = vmatprep.subr.mxu0 0.0
        %747 = vmatpush1.msra.mxu0 0.0
        %748 = vmatprep.subr.mxu0 0.0
        %749 = vmatpush1.msra.mxu0 0.0
        %750 = vmatprep.subr.mxu0 0.0
        %751 = vmatpush1.msra.mxu0 0.0
        %752 = vmatprep.subr.mxu0 0.0
        %753 = vmatpush1.msra.mxu0 0.0
        %754 = vmatprep.subr.mxu0 0.0
        %755 = vmatpush1.msra.mxu0 0.0
        %756 = vmatprep.subr.mxu0 0.0
        %757 = vmatpush1.msra.mxu0 0.0
        %758 = vmatprep.subr.mxu0 0.0
        %759 = vmatpush1.msra.mxu0 0.0
        %760 = vmatprep.subr.mxu0 0.0
        %761 = vmatpush1.msra.mxu0 0.0
        %762 = vmatprep.subr.mxu0 0.0
        %763 = vmatpush1.msra.mxu0 0.0
        %764 = vmatprep.subr.mxu0 0.0
        %765 = vmatpush1.msra.mxu0 0.0
        %766 = vmatprep.subr.mxu0 0.0
        %767 = vmatpush1.msra.mxu0 0.0
        %768 = vmatprep.subr.mxu0 0.0
        %769 = vmatpush1.msra.mxu0 0.0
        %770 = vmatprep.subr.mxu0 0.0
        %771 = vmatpush1.msra.mxu0 0.0
        %772 = vmatprep.subr.mxu0 0.0
        %773 = vmatpush1.msra.mxu0 0.0
        %774 = vmatprep.subr.mxu0 0.0
        %775 = vmatpush1.msra.mxu0 0.0
        %776 = vmatprep.subr.mxu0 0.0
        %777 = vmatpush1.msra.mxu0 0.0
        %778 = vmatprep.mubr.f32.mxu0 0.0
        %779 = vmatmul.mubr.f32.gmra.mrb[0].mxu0 %v708
        %v780 = vpop.f32.mrb[0].mxu0
        %v781 = vadd.f32 0.0, %v780
        %v782 = vpop.f32.mrb[0].mxu0
        %v783 = vadd.f32 0.0, %v782
        %784 = vdwg.mxu0
        %v785 = vadd.f32 %v679, %v781
        %v786 = vadd.f32 %v680, %v783
        %s787 = scalar_lea.vmem [#allocation8], 16
        %v788 = vld [vmem:[%s787] sm:$0xf]
        %v790 = vsel %vm385, %v788, 0
        %v792 = vsel %vm389, %v335, 0
        %v794 = vsel %vm389, %v336, 0
        %796 = vmatprep.subr.mxu0 %v794
        %797 = vmatpush1.msra.mxu0 %v792
        %798 = vmatprep.subr.mxu0 0.0
        %799 = vmatpush1.msra.mxu0 0.0
        %800 = vmatprep.subr.mxu0 0.0
        %801 = vmatpush1.msra.mxu0 0.0
        %802 = vmatprep.subr.mxu0 0.0
        %803 = vmatpush1.msra.mxu0 0.0
        %804 = vmatprep.subr.mxu0 0.0
        %805 = vmatpush1.msra.mxu0 0.0
        %806 = vmatprep.subr.mxu0 0.0
        %807 = vmatpush1.msra.mxu0 0.0
        %808 = vmatprep.subr.mxu0 0.0
        %809 = vmatpush1.msra.mxu0 0.0
        %810 = vmatprep.subr.mxu0 0.0
        %811 = vmatpush1.msra.mxu0 0.0
        %812 = vmatprep.subr.mxu0 0.0
        %813 = vmatpush1.msra.mxu0 0.0
        %814 = vmatprep.subr.mxu0 0.0
        %815 = vmatpush1.msra.mxu0 0.0
        %816 = vmatprep.subr.mxu0 0.0
        %817 = vmatpush1.msra.mxu0 0.0
        %818 = vmatprep.subr.mxu0 0.0
        %819 = vmatpush1.msra.mxu0 0.0
        %820 = vmatprep.subr.mxu0 0.0
        %821 = vmatpush1.msra.mxu0 0.0
        %822 = vmatprep.subr.mxu0 0.0
        %823 = vmatpush1.msra.mxu0 0.0
        %824 = vmatprep.subr.mxu0 0.0
        %825 = vmatpush1.msra.mxu0 0.0
        %826 = vmatprep.subr.mxu0 0.0
        %827 = vmatpush1.msra.mxu0 0.0
        %828 = vmatprep.subr.mxu0 0.0
        %829 = vmatpush1.msra.mxu0 0.0
        %830 = vmatprep.subr.mxu0 0.0
        %831 = vmatpush1.msra.mxu0 0.0
        %832 = vmatprep.subr.mxu0 0.0
        %833 = vmatpush1.msra.mxu0 0.0
        %834 = vmatprep.subr.mxu0 0.0
        %835 = vmatpush1.msra.mxu0 0.0
        %836 = vmatprep.subr.mxu0 0.0
        %837 = vmatpush1.msra.mxu0 0.0
        %838 = vmatprep.subr.mxu0 0.0
        %839 = vmatpush1.msra.mxu0 0.0
        %840 = vmatprep.subr.mxu0 0.0
        %841 = vmatpush1.msra.mxu0 0.0
        %842 = vmatprep.subr.mxu0 0.0
        %843 = vmatpush1.msra.mxu0 0.0
        %844 = vmatprep.subr.mxu0 0.0
        %845 = vmatpush1.msra.mxu0 0.0
        %846 = vmatprep.subr.mxu0 0.0
        %847 = vmatpush1.msra.mxu0 0.0
        %848 = vmatprep.subr.mxu0 0.0
        %849 = vmatpush1.msra.mxu0 0.0
        %850 = vmatprep.subr.mxu0 0.0
        %851 = vmatpush1.msra.mxu0 0.0
        %852 = vmatprep.subr.mxu0 0.0
        %853 = vmatpush1.msra.mxu0 0.0
        %854 = vmatprep.subr.mxu0 0.0
        %855 = vmatpush1.msra.mxu0 0.0
        %856 = vmatprep.subr.mxu0 0.0
        %857 = vmatpush1.msra.mxu0 0.0
        %858 = vmatprep.subr.mxu0 0.0
        %859 = vmatpush1.msra.mxu0 0.0
        %860 = vmatprep.mubr.f32.mxu0 0.0
        %861 = vmatmul.mubr.f32.gmra.mrb[0].mxu0 %v790
        %v862 = vpop.f32.mrb[0].mxu0
        %v863 = vadd.f32 0.0, %v862
        %v864 = vpop.f32.mrb[0].mxu0
        %v865 = vadd.f32 0.0, %v864
        %866 = vdwg.mxu0
        %v867 = vadd.f32 %v785, %v863
        %v868 = vadd.f32 %v786, %v865
        %v869 = vld [vmem:[#allocation2 + $0x8] sm:$0x7f]
        %v870 = vld [vmem:[#allocation2 + $0x10] sm:$0x7f]
        %v871 = vld [vmem:[#allocation2 + $0x18] sm:$0x7f]
        %872 = vrot.lane.b32.xlu0 %v568, 1
        %v873 = vpop.permute.xlu0 %872
        %874 = vrot.lane.b32.xlu0 %v572, 1
        %v875 = vpop.permute.xlu0 %874
        %v876 = vsel %vm704, %v873, %v875
        %v880 = vmul.f32 %v869, %v873
        %v881 = vmul.f32 %v870, %v876
        %v882 = vmul.f32 %v871, %v875
        %s883 = scalar_lea.vmem [#allocation8], 20
        %v884 = vld [vmem:[%s883] sm:$0xf]
        %888 = vrot.lane.b32.xlu0 %v880, 127
        %v889 = vpop.permute.xlu0 %888
        %890 = vrot.lane.b32.xlu0 %v881, 127
        %v891 = vpop.permute.xlu0 %890
        %892 = vrot.lane.b32.xlu0 %v882, 127
        %v893 = vpop.permute.xlu0 %892
        %v894 = vsel %vm685, %v889, %v891
        %v895 = vsel %vm685, %v891, %v893
        %v897 = vsel %vm385, %v884, 0
        %v899 = vsel %vm389, %v894, 0
        %v901 = vsel %vm389, %v895, 0
        %903 = vmatprep.subr.mxu0 %v901
        %904 = vmatpush1.msra.mxu0 %v899
        %905 = vmatprep.subr.mxu0 0.0
        %906 = vmatpush1.msra.mxu0 0.0
        %907 = vmatprep.subr.mxu0 0.0
        %908 = vmatpush1.msra.mxu0 0.0
        %909 = vmatprep.subr.mxu0 0.0
        %910 = vmatpush1.msra.mxu0 0.0
        %911 = vmatprep.subr.mxu0 0.0
        %912 = vmatpush1.msra.mxu0 0.0
        %913 = vmatprep.subr.mxu0 0.0
        %914 = vmatpush1.msra.mxu0 0.0
        %915 = vmatprep.subr.mxu0 0.0
        %916 = vmatpush1.msra.mxu0 0.0
        %917 = vmatprep.subr.mxu0 0.0
        %918 = vmatpush1.msra.mxu0 0.0
        %919 = vmatprep.subr.mxu0 0.0
        %920 = vmatpush1.msra.mxu0 0.0
        %921 = vmatprep.subr.mxu0 0.0
        %922 = vmatpush1.msra.mxu0 0.0
        %923 = vmatprep.subr.mxu0 0.0
        %924 = vmatpush1.msra.mxu0 0.0
        %925 = vmatprep.subr.mxu0 0.0
        %926 = vmatpush1.msra.mxu0 0.0
        %927 = vmatprep.subr.mxu0 0.0
        %928 = vmatpush1.msra.mxu0 0.0
        %929 = vmatprep.subr.mxu0 0.0
        %930 = vmatpush1.msra.mxu0 0.0
        %931 = vmatprep.subr.mxu0 0.0
        %932 = vmatpush1.msra.mxu0 0.0
        %933 = vmatprep.subr.mxu0 0.0
        %934 = vmatpush1.msra.mxu0 0.0
        %935 = vmatprep.subr.mxu0 0.0
        %936 = vmatpush1.msra.mxu0 0.0
        %937 = vmatprep.subr.mxu0 0.0
        %938 = vmatpush1.msra.mxu0 0.0
        %939 = vmatprep.subr.mxu0 0.0
        %940 = vmatpush1.msra.mxu0 0.0
        %941 = vmatprep.subr.mxu0 0.0
        %942 = vmatpush1.msra.mxu0 0.0
        %943 = vmatprep.subr.mxu0 0.0
        %944 = vmatpush1.msra.mxu0 0.0
        %945 = vmatprep.subr.mxu0 0.0
        %946 = vmatpush1.msra.mxu0 0.0
        %947 = vmatprep.subr.mxu0 0.0
        %948 = vmatpush1.msra.mxu0 0.0
        %949 = vmatprep.subr.mxu0 0.0
        %950 = vmatpush1.msra.mxu0 0.0
        %951 = vmatprep.subr.mxu0 0.0
        %952 = vmatpush1.msra.mxu0 0.0
        %953 = vmatprep.subr.mxu0 0.0
        %954 = vmatpush1.msra.mxu0 0.0
        %955 = vmatprep.subr.mxu0 0.0
        %956 = vmatpush1.msra.mxu0 0.0
        %957 = vmatprep.subr.mxu0 0.0
        %958 = vmatpush1.msra.mxu0 0.0
        %959 = vmatprep.subr.mxu0 0.0
        %960 = vmatpush1.msra.mxu0 0.0
        %961 = vmatprep.subr.mxu0 0.0
        %962 = vmatpush1.msra.mxu0 0.0
        %963 = vmatprep.subr.mxu0 0.0
        %964 = vmatpush1.msra.mxu0 0.0
        %965 = vmatprep.subr.mxu0 0.0
        %966 = vmatpush1.msra.mxu0 0.0
        %967 = vmatprep.mubr.f32.mxu0 0.0
        %968 = vmatmul.mubr.f32.gmra.mrb[0].mxu0 %v897
        %v969 = vpop.f32.mrb[0].mxu0
        %v970 = vadd.f32 0.0, %v969
        %v971 = vpop.f32.mrb[0].mxu0
        %v972 = vadd.f32 0.0, %v971
        %973 = vdwg.mxu0
        %v974 = vadd.f32 %v867, %v970
        %v975 = vadd.f32 %v868, %v972
        %976 = vrot.lane.b32.xlu0 %v351, 15
        %v977 = vpop.permute.xlu0 %976
        %978 = vrot.lane.b32.xlu0 %v355, 15
        %v979 = vpop.permute.xlu0 %978
        %v980 = vsel %vm598, %v977, %v979
        %v984 = vmul.f32 %v869, %v977
        %v985 = vmul.f32 %v870, %v980
        %v986 = vmul.f32 %v871, %v979
        %s987 = scalar_lea.vmem [#allocation8], 24
        %v988 = vld [vmem:[%s987] sm:$0xf]
        %992 = vrot.lane.b32.xlu0 %v984, 113
        %v993 = vpop.permute.xlu0 %992
        %994 = vrot.lane.b32.xlu0 %v985, 113
        %v995 = vpop.permute.xlu0 %994
        %996 = vrot.lane.b32.xlu0 %v986, 113
        %v997 = vpop.permute.xlu0 %996
        %v998 = vsel %vm579, %v993, %v995
        %v999 = vsel %vm579, %v995, %v997
        %v1001 = vsel %vm385, %v988, 0
        %v1003 = vsel %vm389, %v998, 0
        %v1005 = vsel %vm389, %v999, 0
        %1007 = vmatprep.subr.mxu0 %v1005
        %1008 = vmatpush1.msra.mxu0 %v1003
        %1009 = vmatprep.subr.mxu0 0.0
        %1010 = vmatpush1.msra.mxu0 0.0
        %1011 = vmatprep.subr.mxu0 0.0
        %1012 = vmatpush1.msra.mxu0 0.0
        %1013 = vmatprep.subr.mxu0 0.0
        %1014 = vmatpush1.msra.mxu0 0.0
        %1015 = vmatprep.subr.mxu0 0.0
        %1016 = vmatpush1.msra.mxu0 0.0
        %1017 = vmatprep.subr.mxu0 0.0
        %1018 = vmatpush1.msra.mxu0 0.0
        %1019 = vmatprep.subr.mxu0 0.0
        %1020 = vmatpush1.msra.mxu0 0.0
        %1021 = vmatprep.subr.mxu0 0.0
        %1022 = vmatpush1.msra.mxu0 0.0
        %1023 = vmatprep.subr.mxu0 0.0
        %1024 = vmatpush1.msra.mxu0 0.0
        %1025 = vmatprep.subr.mxu0 0.0
        %1026 = vmatpush1.msra.mxu0 0.0
        %1027 = vmatprep.subr.mxu0 0.0
        %1028 = vmatpush1.msra.mxu0 0.0
        %1029 = vmatprep.subr.mxu0 0.0
        %1030 = vmatpush1.msra.mxu0 0.0
        %1031 = vmatprep.subr.mxu0 0.0
        %1032 = vmatpush1.msra.mxu0 0.0
        %1033 = vmatprep.subr.mxu0 0.0
        %1034 = vmatpush1.msra.mxu0 0.0
        %1035 = vmatprep.subr.mxu0 0.0
        %1036 = vmatpush1.msra.mxu0 0.0
        %1037 = vmatprep.subr.mxu0 0.0
        %1038 = vmatpush1.msra.mxu0 0.0
        %1039 = vmatprep.subr.mxu0 0.0
        %1040 = vmatpush1.msra.mxu0 0.0
        %1041 = vmatprep.subr.mxu0 0.0
        %1042 = vmatpush1.msra.mxu0 0.0
        %1043 = vmatprep.subr.mxu0 0.0
        %1044 = vmatpush1.msra.mxu0 0.0
        %1045 = vmatprep.subr.mxu0 0.0
        %1046 = vmatpush1.msra.mxu0 0.0
        %1047 = vmatprep.subr.mxu0 0.0
        %1048 = vmatpush1.msra.mxu0 0.0
        %1049 = vmatprep.subr.mxu0 0.0
        %1050 = vmatpush1.msra.mxu0 0.0
        %1051 = vmatprep.subr.mxu0 0.0
        %1052 = vmatpush1.msra.mxu0 0.0
        %1053 = vmatprep.subr.mxu0 0.0
        %1054 = vmatpush1.msra.mxu0 0.0
        %1055 = vmatprep.subr.mxu0 0.0
        %1056 = vmatpush1.msra.mxu0 0.0
        %1057 = vmatprep.subr.mxu0 0.0
        %1058 = vmatpush1.msra.mxu0 0.0
        %1059 = vmatprep.subr.mxu0 0.0
        %1060 = vmatpush1.msra.mxu0 0.0
        %1061 = vmatprep.subr.mxu0 0.0
        %1062 = vmatpush1.msra.mxu0 0.0
        %1063 = vmatprep.subr.mxu0 0.0
        %1064 = vmatpush1.msra.mxu0 0.0
        %1065 = vmatprep.subr.mxu0 0.0
        %1066 = vmatpush1.msra.mxu0 0.0
        %1067 = vmatprep.subr.mxu0 0.0
        %1068 = vmatpush1.msra.mxu0 0.0
        %1069 = vmatprep.subr.mxu0 0.0
        %1070 = vmatpush1.msra.mxu0 0.0
        %1071 = vmatprep.mubr.f32.mxu0 0.0
        %1072 = vmatmul.mubr.f32.gmra.mrb[0].mxu0 %v1001
        %v1073 = vpop.f32.mrb[0].mxu0
        %v1074 = vadd.f32 0.0, %v1073
        %v1075 = vpop.f32.mrb[0].mxu0
        %v1076 = vadd.f32 0.0, %v1075
        %1077 = vdwg.mxu0
        %v1078 = vadd.f32 %v974, %v1074
        %v1079 = vadd.f32 %v975, %v1076
        %s1080 = scalar_lea.vmem [#allocation8], 28
        %v1081 = vld [vmem:[%s1080] sm:$0xf]
        %1085 = vrot.lane.b32.xlu0 %v869, 112
        %v1086 = vpop.permute.xlu0 %1085
        %1087 = vrot.lane.b32.xlu0 %v870, 112
        %v1088 = vpop.permute.xlu0 %1087
        %1089 = vrot.lane.b32.xlu0 %v871, 112
        %v1090 = vpop.permute.xlu0 %1089
        %vm1091 = vcmask 916480
        %v1092 = vsel %vm1091, %v1086, %v1088
        %v1093 = vsel %vm1091, %v1088, %v1090
        %v1095 = vsel %vm385, %v1081, 0
        %v1097 = vsel %vm389, %v1092, 0
        %v1099 = vsel %vm389, %v1093, 0
        %1101 = vmatprep.subr.mxu0 %v1099
        %1102 = vmatpush1.msra.mxu0 %v1097
        %1103 = vmatprep.subr.mxu0 0.0
        %1104 = vmatpush1.msra.mxu0 0.0
        %1105 = vmatprep.subr.mxu0 0.0
        %1106 = vmatpush1.msra.mxu0 0.0
        %1107 = vmatprep.subr.mxu0 0.0
        %1108 = vmatpush1.msra.mxu0 0.0
        %1109 = vmatprep.subr.mxu0 0.0
        %1110 = vmatpush1.msra.mxu0 0.0
        %1111 = vmatprep.subr.mxu0 0.0
        %1112 = vmatpush1.msra.mxu0 0.0
        %1113 = vmatprep.subr.mxu0 0.0
        %1114 = vmatpush1.msra.mxu0 0.0
        %1115 = vmatprep.subr.mxu0 0.0
        %1116 = vmatpush1.msra.mxu0 0.0
        %1117 = vmatprep.subr.mxu0 0.0
        %1118 = vmatpush1.msra.mxu0 0.0
        %1119 = vmatprep.subr.mxu0 0.0
        %1120 = vmatpush1.msra.mxu0 0.0
        %1121 = vmatprep.subr.mxu0 0.0
        %1122 = vmatpush1.msra.mxu0 0.0
        %1123 = vmatprep.subr.mxu0 0.0
        %1124 = vmatpush1.msra.mxu0 0.0
        %1125 = vmatprep.subr.mxu0 0.0
        %1126 = vmatpush1.msra.mxu0 0.0
        %1127 = vmatprep.subr.mxu0 0.0
        %1128 = vmatpush1.msra.mxu0 0.0
        %1129 = vmatprep.subr.mxu0 0.0
        %1130 = vmatpush1.msra.mxu0 0.0
        %1131 = vmatprep.subr.mxu0 0.0
        %1132 = vmatpush1.msra.mxu0 0.0
        %1133 = vmatprep.subr.mxu0 0.0
        %1134 = vmatpush1.msra.mxu0 0.0
        %1135 = vmatprep.subr.mxu0 0.0
        %1136 = vmatpush1.msra.mxu0 0.0
        %1137 = vmatprep.subr.mxu0 0.0
        %1138 = vmatpush1.msra.mxu0 0.0
        %1139 = vmatprep.subr.mxu0 0.0
        %1140 = vmatpush1.msra.mxu0 0.0
        %1141 = vmatprep.subr.mxu0 0.0
        %1142 = vmatpush1.msra.mxu0 0.0
        %1143 = vmatprep.subr.mxu0 0.0
        %1144 = vmatpush1.msra.mxu0 0.0
        %1145 = vmatprep.subr.mxu0 0.0
        %1146 = vmatpush1.msra.mxu0 0.0
        %1147 = vmatprep.subr.mxu0 0.0
        %1148 = vmatpush1.msra.mxu0 0.0
        %1149 = vmatprep.subr.mxu0 0.0
        %1150 = vmatpush1.msra.mxu0 0.0
        %1151 = vmatprep.subr.mxu0 0.0
        %1152 = vmatpush1.msra.mxu0 0.0
        %1153 = vmatprep.subr.mxu0 0.0
        %1154 = vmatpush1.msra.mxu0 0.0
        %1155 = vmatprep.subr.mxu0 0.0
        %1156 = vmatpush1.msra.mxu0 0.0
        %1157 = vmatprep.subr.mxu0 0.0
        %1158 = vmatpush1.msra.mxu0 0.0
        %1159 = vmatprep.subr.mxu0 0.0
        %1160 = vmatpush1.msra.mxu0 0.0
        %1161 = vmatprep.subr.mxu0 0.0
        %1162 = vmatpush1.msra.mxu0 0.0
        %1163 = vmatprep.subr.mxu0 0.0
        %1164 = vmatpush1.msra.mxu0 0.0
        %1165 = vmatprep.mubr.f32.mxu0 0.0
        %1166 = vmatmul.mubr.f32.gmra.mrb[0].mxu0 %v1095
        %v1167 = vpop.f32.mrb[0].mxu0
        %v1168 = vadd.f32 0.0, %v1167
        %v1169 = vpop.f32.mrb[0].mxu0
        %v1170 = vadd.f32 0.0, %v1169
        %1171 = vdwg.mxu0
        %v1172 = vadd.f32 %v1078, %v1168
        %v1173 = vadd.f32 %v1079, %v1170
        %1174 = vrot.lane.b32.xlu0 %v568, 17
        %v1175 = vpop.permute.xlu0 %1174
        %1176 = vrot.lane.b32.xlu0 %v572, 17
        %v1177 = vpop.permute.xlu0 %1176
        %v1178 = vsel %vm474, %v1175, %v1177
        %v1182 = vmul.f32 %v869, %v1175
        %v1183 = vmul.f32 %v870, %v1178
        %v1184 = vmul.f32 %v871, %v1177
        %s1185 = scalar_lea.vmem [#allocation8], 32
        %v1186 = vld [vmem:[%s1185] sm:$0xf]
        %1190 = vrot.lane.b32.xlu0 %v1182, 111
        %v1191 = vpop.permute.xlu0 %1190
        %1192 = vrot.lane.b32.xlu0 %v1183, 111
        %v1193 = vpop.permute.xlu0 %1192
        %1194 = vrot.lane.b32.xlu0 %v1184, 111
        %v1195 = vpop.permute.xlu0 %1194
        %v1196 = vsel %vm362, %v1191, %v1193
        %v1197 = vsel %vm362, %v1193, %v1195
        %v1199 = vsel %vm385, %v1186, 0
        %v1201 = vsel %vm389, %v1196, 0
        %v1203 = vsel %vm389, %v1197, 0
        %1205 = vmatprep.subr.mxu0 %v1203
        %1206 = vmatpush1.msra.mxu0 %v1201
        %1207 = vmatprep.subr.mxu0 0.0
        %1208 = vmatpush1.msra.mxu0 0.0
        %1209 = vmatprep.subr.mxu0 0.0
        %1210 = vmatpush1.msra.mxu0 0.0
        %1211 = vmatprep.subr.mxu0 0.0
        %1212 = vmatpush1.msra.mxu0 0.0
        %1213 = vmatprep.subr.mxu0 0.0
        %1214 = vmatpush1.msra.mxu0 0.0
        %1215 = vmatprep.subr.mxu0 0.0
        %1216 = vmatpush1.msra.mxu0 0.0
        %1217 = vmatprep.subr.mxu0 0.0
        %1218 = vmatpush1.msra.mxu0 0.0
        %1219 = vmatprep.subr.mxu0 0.0
        %1220 = vmatpush1.msra.mxu0 0.0
        %1221 = vmatprep.subr.mxu0 0.0
        %1222 = vmatpush1.msra.mxu0 0.0
        %1223 = vmatprep.subr.mxu0 0.0
        %1224 = vmatpush1.msra.mxu0 0.0
        %1225 = vmatprep.subr.mxu0 0.0
        %1226 = vmatpush1.msra.mxu0 0.0
        %1227 = vmatprep.subr.mxu0 0.0
        %1228 = vmatpush1.msra.mxu0 0.0
        %1229 = vmatprep.subr.mxu0 0.0
        %1230 = vmatpush1.msra.mxu0 0.0
        %1231 = vmatprep.subr.mxu0 0.0
        %1232 = vmatpush1.msra.mxu0 0.0
        %1233 = vmatprep.subr.mxu0 0.0
        %1234 = vmatpush1.msra.mxu0 0.0
        %1235 = vmatprep.subr.mxu0 0.0
        %1236 = vmatpush1.msra.mxu0 0.0
        %1237 = vmatprep.subr.mxu0 0.0
        %1238 = vmatpush1.msra.mxu0 0.0
        %1239 = vmatprep.subr.mxu0 0.0
        %1240 = vmatpush1.msra.mxu0 0.0
        %1241 = vmatprep.subr.mxu0 0.0
        %1242 = vmatpush1.msra.mxu0 0.0
        %1243 = vmatprep.subr.mxu0 0.0
        %1244 = vmatpush1.msra.mxu0 0.0
        %1245 = vmatprep.subr.mxu0 0.0
        %1246 = vmatpush1.msra.mxu0 0.0
        %1247 = vmatprep.subr.mxu0 0.0
        %1248 = vmatpush1.msra.mxu0 0.0
        %1249 = vmatprep.subr.mxu0 0.0
        %1250 = vmatpush1.msra.mxu0 0.0
        %1251 = vmatprep.subr.mxu0 0.0
        %1252 = vmatpush1.msra.mxu0 0.0
        %1253 = vmatprep.subr.mxu0 0.0
        %1254 = vmatpush1.msra.mxu0 0.0
        %1255 = vmatprep.subr.mxu0 0.0
        %1256 = vmatpush1.msra.mxu0 0.0
        %1257 = vmatprep.subr.mxu0 0.0
        %1258 = vmatpush1.msra.mxu0 0.0
        %1259 = vmatprep.subr.mxu0 0.0
        %1260 = vmatpush1.msra.mxu0 0.0
        %1261 = vmatprep.subr.mxu0 0.0
        %1262 = vmatpush1.msra.mxu0 0.0
        %1263 = vmatprep.subr.mxu0 0.0
        %1264 = vmatpush1.msra.mxu0 0.0
        %1265 = vmatprep.subr.mxu0 0.0
        %1266 = vmatpush1.msra.mxu0 0.0
        %1267 = vmatprep.subr.mxu0 0.0
        %1268 = vmatpush1.msra.mxu0 0.0
        %1269 = vmatprep.mubr.f32.mxu0 0.0
        %1270 = vmatmul.mubr.f32.gmra.mrb[0].mxu0 %v1199
        %v1271 = vpop.f32.mrb[0].mxu0
        %v1272 = vadd.f32 0.0, %v1271
        %v1273 = vpop.f32.mrb[0].mxu0
        %v1274 = vadd.f32 0.0, %v1273
        %1275 = vdwg.mxu0
        %v1276 = vadd.f32 %v1172, %v1272
        %v1277 = vadd.f32 %v1173, %v1274
        %v1278 = vld [vmem:[#allocation9] sm:$0xf]
        %1280 = vset.pattern.permute.xlu0 0
        %1281 = vperm.xlu0 %1280, %v1278
        %v1282 = vpop.permute.xlu0 %1281
        %v1284 = vadd.f32 %v1276, %v1282
        %v1285 = vadd.f32 %v1277, %v1282
        %v1286 = vmax.f32 %v1284, 0.0
        %v1287 = vmax.f32 %v1285, 0.0
        %v1290 = vcombine.low %v1286, %v1287
        %1292 = vst [vmem:[%s317] sm:$0xff] %v1290
        %s1293 = sand.u32 %s149, 1
        %s1294 = scalar_lea.sflag [#allocation5], %s1293
        %s1295 = sand.u32 %s149, 1
        %s1296 = smul.addr %s1295, 8
        %s1297 = scalar_lea.vmem [#allocation12], %s1296
        // Predicated region
        $region61: #{tpu_custom_call.1} parent=39 // pred_check
          %p1298 = pneg %p159
        $region62: #{tpu_custom_call.1} parent=39 // pred_check_branch
          %1300 = sbr.rel (%p1298) target = $region64
        $region63: #{tpu_custom_call.1} parent=39 // pred_region
          %s1302 = ssub.s32 128, 128
          %1303 = vsyncadd %s1294, %s1302
          %s1304 = smul.addr %s26, 2
          %s1305 = smul.addr %s1304, 64
          %s1306 = scalar_lea.hbm %s5, %s1305
          %s1308 = sshll.u32 %s1297, 4
          %s1309 = int_to_ptr.vmem [resolvable:$true] %s1308
          %1311 = dma.vmem_to_hbm [thread:$0]  %s1309, 128, %s1306, %s1294
        $region64: #{tpu_custom_call.1} parent=39 // pred_fallthru
          _
      $region40: #{tpu_custom_call.1} parent=5 // pred_fallthru
        _
      %p1312 = scmp.le.s32.totalorder 2, %s21
      // Predicated region
      $region65: #{tpu_custom_call.1} parent=5 // pred_check
        %p1313 = pneg %p1312
      $region66: #{tpu_custom_call.1} parent=5 // pred_check_branch
        %1315 = sbr.rel (%p1313) target = $region68
      $region67: #{tpu_custom_call.1} parent=5 // pred_region
        %s1316 = ssub.s32 %s21, 2
        // Predicated region
        $region69: #{tpu_custom_call.1} parent=67 // pred_check
          %p1317 = pneg %p165
        $region70: #{tpu_custom_call.1} parent=67 // pred_check_branch
          %1319 = sbr.rel (%p1317) target = $region72
        $region71: #{tpu_custom_call.1} parent=67 // pred_region
          %s1320 = sand.u32 %s150, 1
          %s1321 = scalar_lea.sflag [#allocation5], %s1320
          %s1322 = sand.u32 %s150, 1
          %s1323 = smul.addr %s1322, 8
          %s1324 = scalar_lea.vmem [#allocation12], %s1323
          %1325 = dma.done %s1321, 128
        $region72: #{tpu_custom_call.1} parent=67 // pred_fallthru
          _
      $region68: #{tpu_custom_call.1} parent=5 // pred_fallthru
        _
    $region6: #{tpu_custom_call.1} parent=1 // loop_footer
      %s25 = sadd.s32 1, %s21
    $region7: #{tpu_custom_call.1} parent=1 // loop_footer_branch
      %20 = sbr.rel target = $region3
    $region8: #{tpu_custom_call.1} parent=1 // loop_exit
      _
    %1326 = vsyncpa [#allocation4], 1
    %s1327 = scalar_lea.sflag [#allocation4], 1
    %1328 = vsyncpa %s1327, 1
    %1329 = vsyncpa [#allocation7], 1
    %s1330 = scalar_lea.sflag [#allocation7], 1
    %1331 = vsyncpa %s1330, 1
    %1332 = vsyncpa [#allocation10], 1
    %1333 = vsyncpa [#allocation5], 1
    %s1334 = scalar_lea.sflag [#allocation5], 1
    %1335 = vsyncpa %s1334, 1

</llo_original>
